<compile_context>
chip_gen: v7x
topology: tpu7x:2x2x1
jax: 0.10.0
libtpu: 0.0.40
codegen_flags: <defaults>
</compile_context>

<pallas_src>
import jax
import jax.numpy as jnp
from jax.experimental import pallas as pl
from jax.experimental.pallas import tpu as pltpu

KSIZE = 8     # Conv1d kernel_size
POOL = 4      # MaxPool1d(4, stride=4)
BN_EPS = 1e-5
HIDDEN = 64   # classifier hidden width


# ---------------------------------------------------------------------------
# In-kernel helpers (values only — no scratch, no strided gathers)
# ---------------------------------------------------------------------------
def _window_max(v, start):
    """Max over POOL consecutive rows of axis 1 (keepdims), as a maximum tree."""
    m = v[:, start:start + 1, :]
    for j in range(1, POOL):
        m = jnp.maximum(m, v[:, start + j:start + j + 1, :])
    return m


def _maxpool_seq(v, lp_out):
    """MaxPool1d(POOL, POOL) along axis 1 of (TB, L, C); drops the tail like torch."""
    return jnp.concatenate([_window_max(v, POOL * lp) for lp in range(lp_out)], axis=1)


# ---------------------------------------------------------------------------
# Fused kernel: conv block 0 + conv block 1 + classifier (one batch tile)
# ---------------------------------------------------------------------------
def _audionet_kernel(x_ref, w0_ref, s0_ref, t0_ref, w1_ref, s1_ref, t1_ref,
                     lw1_ref, lb1_ref, lw2_ref, lb2_ref,
                     score_ref, h1_ref):
    """x_ref: (TB, T, Cin0) batch tile.

    w0: (K*Cin0, C0)  w1: (K*C0, C1)     im2col weight layout
    s*/t*: (1, C)     BN(eval) scale / shift with conv bias folded in
    lw1: (Lp1*C1, HIDDEN)  rows pre-permuted to the kernel's l-major flatten
    lw2: (HIDDEN, num_out) ; lb*: (1, ·)
    score_ref: (TB, 1, num_out)   h1_ref: (TB, Lp1, C1)
    """
    TB, T, _ = x_ref.shape
    Lc0 = T - KSIZE + 1
    Lp0 = Lc0 // POOL
    Lc1 = Lp0 - KSIZE + 1
    Lp1 = Lc1 // POOL

    # ---- conv block 0: batched im2col (K lane concats) + ONE batched MXU matmul.
    cols0 = jnp.concatenate([x_ref[:, k:k + Lc0, :] for k in range(KSIZE)],
                            axis=-1)                               # (TB, Lc0, K*Cin0)
    w0b = jnp.broadcast_to(w0_ref[...], (TB,) + w0_ref.shape)
    c0 = jnp.einsum('blk,bko->blo', cols0, w0b,
                    preferred_element_type=jnp.float32)            # (TB, Lc0, C0)
    # MaxPool1d(4,4) stays in vregs; BN0 (eval) with the conv bias folded in.
    h0 = _maxpool_seq(c0, Lp0) * s0_ref[...] + t0_ref[...]         # (TB, Lp0, C0)

    # ---- conv block 1: identical structure, batched across the tile.
    cols1 = jnp.concatenate([h0[:, k:k + Lc1, :] for k in range(KSIZE)],
                            axis=-1)                               # (TB, Lc1, K*C0)
    w1b = jnp.broadcast_to(w1_ref[...], (TB,) + w1_ref.shape)
    c1 = jnp.einsum('blk,bko->blo', cols1, w1b,
                    preferred_element_type=jnp.float32)            # (TB, Lc1, C1)
    h1 = _maxpool_seq(c1, Lp1) * s1_ref[...] + t1_ref[...]         # (TB, Lp1, C1)
    h1_ref[...] = h1.astype(h1_ref.dtype)

    # ---- classifier: Linear -> Tanh -> Dropout(eval) -> Linear.
    # flatten is built l-major on the lane axis; PyTorch's channel-major
    # x.view(B, -1) permutation is pre-folded into lw1's row order on the host,
    # so no permutation matmul and no extra flatten output are needed here.
    flat_l = jnp.concatenate([h1[:, l:l + 1, :] for l in range(Lp1)],
                             axis=-1)                              # (TB, 1, Lp1*C1)
    lw1b = jnp.broadcast_to(lw1_ref[...], (TB,) + lw1_ref.shape)
    hid = jnp.tanh(jnp.einsum('bif,bfh->bih', flat_l, lw1b,
                              preferred_element_type=jnp.float32) + lb1_ref[...])
    # TODO(synk): nn.Dropout training-mode masking omitted (eval-mode identity).
    lw2b = jnp.broadcast_to(lw2_ref[...], (TB,) + lw2_ref.shape)
    score = jnp.einsum('bih,bho->bio', hid, lw2b,
                       preferred_element_type=jnp.float32) + lb2_ref[...]
    score_ref[...] = score.astype(score_ref.dtype)                 # (TB, 1, num_out)


# ---------------------------------------------------------------------------
# Wrapper
# ---------------------------------------------------------------------------
def audionet_forward(x, params, *, block_b=2):
    """x: (B, T, NUM_MELS) — same layout as the PyTorch module's input."""
    p = params
    B, T, cin = x.shape
    C0 = p["w0"].shape[1]
    C1 = p["w1"].shape[1]
    H = p["lw1"].shape[1]
    num_out = p["lw2"].shape[1]
    Lc0 = T - KSIZE + 1
    Lp0 = Lc0 // POOL
    Lc1 = Lp0 - KSIZE + 1
    Lp1 = Lc1 // POOL
    if min(Lc0, Lp0, Lc1, Lp1) < 1:
        raise ValueError(f"sequence length T={T} too short for the conv/pool stack")
    flat_dim = C1 * Lp1
    assert p["lw1"].shape[0] == flat_dim, (p["lw1"].shape, flat_dim)

    # Batch tile: largest divisor of B not exceeding the request.
    block_b = max(1, min(block_b, B))
    while B % block_b:
        block_b -= 1

    # Host-side folding (constants w.r.t. the forward pass):
    #  * BN(eval) + conv bias -> one per-channel affine (scale, shift),
    #  * PyTorch channel-major flatten permutation -> reordered lw1 rows.
    s0 = p["g0"] * jax.lax.rsqrt(p["v0"] + BN_EPS)
    t0 = p["be0"] + (p["b0"] - p["mu0"]) * s0
    s1 = p["g1"] * jax.lax.rsqrt(p["v1"] + BN_EPS)
    t1 = p["be1"] + (p["b1"] - p["mu1"]) * s1
    lw1_lmaj = (p["lw1"].reshape(C1, Lp1, H).transpose(1, 0, 2)
                .reshape(Lp1 * C1, H))

    def full(shape):
        return pl.BlockSpec(shape, lambda i, _n=len(shape): (0,) * _n)

    def batched(shape):
        return pl.BlockSpec(shape, lambda i, _n=len(shape): (i,) + (0,) * (_n - 1))

    score3, h1 = pl.pallas_call(
        _audionet_kernel,
        grid=(B // block_b,),
        in_specs=[batched((block_b, T, cin)),
                  full((KSIZE * cin, C0)), full((1, C0)), full((1, C0)),
                  full((KSIZE * C0, C1)), full((1, C1)), full((1, C1)),
                  full((flat_dim, H)), full((1, H)),
                  full((H, num_out)), full((1, num_out))],
        out_specs=[batched((block_b, 1, num_out)),
                   batched((block_b, Lp1, C1))],
        out_shape=(jax.ShapeDtypeStruct((B, 1, num_out), jnp.float32),
                   jax.ShapeDtypeStruct((B, Lp1, C1), jnp.float32)),
        compiler_params=pltpu.CompilerParams(
            dimension_semantics=("parallel",),          # megacore over batch tiles
            vmem_limit_bytes=16 * 1024 * 1024),         # tiny kernel, explicit budget
    )(x, p["w0"], s0, t0, p["w1"], s1, t1, lw1_lmaj, p["lb1"], p["lw2"], p["lb2"])

    score = score3.reshape(B, num_out)
    # PyTorch x.view(B, -1) on NCL == channel-major flatten of (B, Lp1, C1).
    flatten = jnp.transpose(h1, (0, 2, 1)).reshape(B, flat_dim)
    return score, flatten


# ---------------------------------------------------------------------------
# Pure-JAX reference (independent code path) for validation
# ---------------------------------------------------------------------------
def _ref_conv_block(x, w_flat, b, gamma, beta, mean, var):
    B, L, Cin = x.shape
    Cout = w_flat.shape[1]
    Lc = L - KSIZE + 1
    Lp = Lc // POOL
    w = w_flat.reshape(KSIZE, Cin, Cout)
    xs = jnp.stack([x[:, k:k + Lc, :] for k in range(KSIZE)], axis=2)  # (B,Lc,K,Cin)
    conv = jnp.einsum("blkc,kco->blo", xs, w) + b                      # (B,Lc,Cout)
    pooled = conv[:, :Lp * POOL, :].reshape(B, Lp, POOL, Cout).max(axis=2)
    scale = gamma * jax.lax.rsqrt(var + BN_EPS)
    return (pooled - mean) * scale + beta


def _ref_forward(x, p):
    h0 = _ref_conv_block(x, p["w0"], p["b0"], p["g0"], p["be0"], p["mu0"], p["v0"])
    h1 = _ref_conv_block(h0, p["w1"], p["b1"], p["g1"], p["be1"], p["mu1"], p["v1"])
    B, Lp1, C1 = h1.shape
    flatten = jnp.transpose(h1, (0, 2, 1)).reshape(B, C1 * Lp1)
    h = jnp.tanh(flatten @ p["lw1"] + p["lb1"])
    score = h @ p["lw2"] + p["lb2"]
    return score, flatten


# ---------------------------------------------------------------------------
# Deterministic parameter init (kaiming_uniform conv / xavier_uniform linear)
# ---------------------------------------------------------------------------
def init_params(key, num_mels, flatten_dim, num_output):
    ks = jax.random.split(key, 8)

    def kaiming_conv(k, cout, cin):
        fan_in = cin * KSIZE
        bound = (6.0 / fan_in) ** 0.5
        w = jax.random.uniform(k, (cout, cin, KSIZE), jnp.float32, -bound, bound)
        # torch (Cout, Cin, K) -> im2col layout (K*Cin, Cout)
        return jnp.transpose(w, (2, 1, 0)).reshape(KSIZE * cin, cout)

    def conv_bias(k, cout, cin):
        bound = 1.0 / ((cin * KSIZE) ** 0.5)
        return jax.random.uniform(k, (1, cout), jnp.float32, -bound, bound)

    def xavier_linear(k, fin, fout):
        bound = (6.0 / (fin + fout)) ** 0.5
        return jax.random.uniform(k, (fin, fout), jnp.float32, -bound, bound)

    def linear_bias(k, fin, fout):
        bound = 1.0 / (fin ** 0.5)
        return jax.random.uniform(k, (1, fout), jnp.float32, -bound, bound)

    C0, C1 = 32, 32
    ones = lambda c: jnp.ones((1, c), jnp.float32)
    zeros = lambda c: jnp.zeros((1, c), jnp.float32)
    return {
        "w0": kaiming_conv(ks[0], C0, num_mels), "b0": conv_bias(ks[1], C0, num_mels),
        "g0": ones(C0), "be0": zeros(C0), "mu0": zeros(C0), "v0": ones(C0),
        "w1": kaiming_conv(ks[2], C1, C0), "b1": conv_bias(ks[3], C1, C0),
        "g1": ones(C1), "be1": zeros(C1), "mu1": zeros(C1), "v1": ones(C1),
        "lw1": xavier_linear(ks[4], flatten_dim, HIDDEN),
        "lb1": linear_bias(ks[5], flatten_dim, HIDDEN),
        "lw2": xavier_linear(ks[6], HIDDEN, num_output),
        "lb2": linear_bias(ks[7], HIDDEN, num_output),
    }


if __name__ == "__main__":
    key = jax.random.PRNGKey(0)
    B, T, NUM_MELS = 4, 71, 8          # small shapes; input is (B, T, NUM_MELS)
    NUM_OUTPUT = 4                     # config.LABEL_NAME == 'Label_kMean_4'

    # Flatten dim: T -conv-> T-7 -pool-> //4 -conv-> -7 -pool-> //4, *32 ch
    l0 = (T - KSIZE + 1) // POOL
    l1 = (l0 - KSIZE + 1) // POOL
    flatten_dim = 32 * l1              # = 64 here (original hard-codes 976)

    k_x, k_p = jax.random.split(key)
    x = jax.random.normal(k_x, (B, T, NUM_MELS), jnp.float32)
    params = init_params(k_p, NUM_MELS, flatten_dim, NUM_OUTPUT)

    fwd = jax.jit(lambda xx, pp: audionet_forward(xx, pp, block_b=2))
    score, flatten = jax.block_until_ready(fwd(x, params))

    ref_score, ref_flatten = _ref_forward(x, params)
    assert score.shape == (B, NUM_OUTPUT) and flatten.shape == (B, flatten_dim)
    assert jnp.allclose(flatten, ref_flatten, atol=2e-3, rtol=2e-3), \
        float(jnp.max(jnp.abs(flatten - ref_flatten)))
    assert jnp.allclose(score, ref_score, atol=2e-3, rtol=2e-3), \
        float(jnp.max(jnp.abs(score - ref_score)))

    print("KERNEL_OK")
</pallas_src>

<mosaic_0001>
module attributes {stable_mosaic.version = 11 : i64} {
  func.func @_audionet_kernel(%arg0: i32, %arg1: memref<2x71x8xf32, #tpu.memory_space<vmem>>, %arg2: memref<64x32xf32, #tpu.memory_space<vmem>>, %arg3: memref<1x32xf32, #tpu.memory_space<vmem>>, %arg4: memref<1x32xf32, #tpu.memory_space<vmem>>, %arg5: memref<256x32xf32, #tpu.memory_space<vmem>>, %arg6: memref<1x32xf32, #tpu.memory_space<vmem>>, %arg7: memref<1x32xf32, #tpu.memory_space<vmem>>, %arg8: memref<64x64xf32, #tpu.memory_space<vmem>>, %arg9: memref<1x64xf32, #tpu.memory_space<vmem>>, %arg10: memref<64x4xf32, #tpu.memory_space<vmem>>, %arg11: memref<1x4xf32, #tpu.memory_space<vmem>>, %arg12: memref<2x1x4xf32, #tpu.memory_space<vmem>>, %arg13: memref<2x2x32xf32, #tpu.memory_space<vmem>>) attributes {dimension_semantics = [#tpu.dimension_semantics<parallel>], iteration_bounds = array<i64: 2>, scalar_prefetch = 0 : i64, scratch_operands = 0 : i64, tpu.core_type = #tpu.core_type<tc>, window_params = [{transform_indices = @transform_0, window_bounds = array<i64: 2, 71, 8>}, {pipeline_mode = #tpu.pipeline_mode<synchronous>, transform_indices = @transform_1, window_bounds = array<i64: 64, 32>}, {pipeline_mode = #tpu.pipeline_mode<synchronous>, transform_indices = @transform_2, window_bounds = array<i64: 1, 32>}, {pipeline_mode = #tpu.pipeline_mode<synchronous>, transform_indices = @transform_3, window_bounds = array<i64: 1, 32>}, {pipeline_mode = #tpu.pipeline_mode<synchronous>, transform_indices = @transform_4, window_bounds = array<i64: 256, 32>}, {pipeline_mode = #tpu.pipeline_mode<synchronous>, transform_indices = @transform_5, window_bounds = array<i64: 1, 32>}, {pipeline_mode = #tpu.pipeline_mode<synchronous>, transform_indices = @transform_6, window_bounds = array<i64: 1, 32>}, {pipeline_mode = #tpu.pipeline_mode<synchronous>, transform_indices = @transform_7, window_bounds = array<i64: 64, 64>}, {pipeline_mode = #tpu.pipeline_mode<synchronous>, transform_indices = @transform_8, window_bounds = array<i64: 1, 64>}, {pipeline_mode = #tpu.pipeline_mode<synchronous>, transform_indices = @transform_9, window_bounds = array<i64: 64, 4>}, {pipeline_mode = #tpu.pipeline_mode<synchronous>, transform_indices = @transform_10, window_bounds = array<i64: 1, 4>}, {transform_indices = @transform_11, window_bounds = array<i64: 2, 1, 4>}, {transform_indices = @transform_12, window_bounds = array<i64: 2, 2, 32>}]} {
    %c0 = arith.constant 0 : index
    %c0_0 = arith.constant 0 : index
    %c0_1 = arith.constant 0 : index
    %0 = vector.load %arg1[%c0, %c0_0, %c0_1] : memref<2x71x8xf32, #tpu.memory_space<vmem>>, vector<2x64x8xf32>
    %c0_2 = arith.constant 0 : index
    %c1 = arith.constant 1 : index
    %c0_3 = arith.constant 0 : index
    %1 = vector.load %arg1[%c0_2, %c1, %c0_3] : memref<2x71x8xf32, #tpu.memory_space<vmem>>, vector<2x64x8xf32>
    %c0_4 = arith.constant 0 : index
    %c2 = arith.constant 2 : index
    %c0_5 = arith.constant 0 : index
    %2 = vector.load %arg1[%c0_4, %c2, %c0_5] : memref<2x71x8xf32, #tpu.memory_space<vmem>>, vector<2x64x8xf32>
    %c0_6 = arith.constant 0 : index
    %c3 = arith.constant 3 : index
    %c0_7 = arith.constant 0 : index
    %3 = vector.load %arg1[%c0_6, %c3, %c0_7] : memref<2x71x8xf32, #tpu.memory_space<vmem>>, vector<2x64x8xf32>
    %c0_8 = arith.constant 0 : index
    %c4 = arith.constant 4 : index
    %c0_9 = arith.constant 0 : index
    %4 = vector.load %arg1[%c0_8, %c4, %c0_9] : memref<2x71x8xf32, #tpu.memory_space<vmem>>, vector<2x64x8xf32>
    %c0_10 = arith.constant 0 : index
    %c5 = arith.constant 5 : index
    %c0_11 = arith.constant 0 : index
    %5 = vector.load %arg1[%c0_10, %c5, %c0_11] : memref<2x71x8xf32, #tpu.memory_space<vmem>>, vector<2x64x8xf32>
    %c0_12 = arith.constant 0 : index
    %c6 = arith.constant 6 : index
    %c0_13 = arith.constant 0 : index
    %6 = vector.load %arg1[%c0_12, %c6, %c0_13] : memref<2x71x8xf32, #tpu.memory_space<vmem>>, vector<2x64x8xf32>
    %c0_14 = arith.constant 0 : index
    %c7 = arith.constant 7 : index
    %c0_15 = arith.constant 0 : index
    %7 = vector.load %arg1[%c0_14, %c7, %c0_15] : memref<2x71x8xf32, #tpu.memory_space<vmem>>, vector<2x64x8xf32>
    %8 = tpu.concatenate %0, %1, %2, %3, %4, %5, %6, %7 in 2 : vector<2x64x8xf32>, vector<2x64x8xf32>, vector<2x64x8xf32>, vector<2x64x8xf32>, vector<2x64x8xf32>, vector<2x64x8xf32>, vector<2x64x8xf32>, vector<2x64x8xf32> -> vector<2x64x64xf32>
    %c0_16 = arith.constant 0 : index
    %c0_17 = arith.constant 0 : index
    %9 = vector.load %arg2[%c0_16, %c0_17] : memref<64x32xf32, #tpu.memory_space<vmem>>, vector<64x32xf32>
    %10 = vector.shape_cast %9 : vector<64x32xf32> to vector<1x64x32xf32>
    %11 = vector.broadcast %10 : vector<1x64x32xf32> to vector<2x64x32xf32>
    "tpu.trace_start"() <{level = 10 : i32, message = "blk,bko->blo"}> : () -> ()
    %cst = arith.constant dense<0.000000e+00> : vector<2x64x32xf32>
    %12 = tpu.matmul %8, %11, %cst {dimension_numbers = #tpu.dot_dimension_numbers<[2], [1], [1], [2], [0, 0, 0, 1, 1, 2], [0], [0]>} : vector<2x64x64xf32>, vector<2x64x32xf32>, vector<2x64x32xf32> -> vector<2x64x32xf32>
    "tpu.trace_stop"() : () -> ()
    %13 = vector.extract_strided_slice %12 {offsets = [0, 0, 0], sizes = [2, 1, 32], strides = [1, 1, 1]} : vector<2x64x32xf32> to vector<2x1x32xf32>
    %14 = vector.extract_strided_slice %12 {offsets = [0, 1, 0], sizes = [2, 1, 32], strides = [1, 1, 1]} : vector<2x64x32xf32> to vector<2x1x32xf32>
    %15 = arith.maximumf %13, %14 : vector<2x1x32xf32>
    %16 = vector.extract_strided_slice %12 {offsets = [0, 2, 0], sizes = [2, 1, 32], strides = [1, 1, 1]} : vector<2x64x32xf32> to vector<2x1x32xf32>
    %17 = arith.maximumf %15, %16 : vector<2x1x32xf32>
    %18 = vector.extract_strided_slice %12 {offsets = [0, 3, 0], sizes = [2, 1, 32], strides = [1, 1, 1]} : vector<2x64x32xf32> to vector<2x1x32xf32>
    %19 = arith.maximumf %17, %18 : vector<2x1x32xf32>
    %20 = vector.extract_strided_slice %12 {offsets = [0, 4, 0], sizes = [2, 1, 32], strides = [1, 1, 1]} : vector<2x64x32xf32> to vector<2x1x32xf32>
    %21 = vector.extract_strided_slice %12 {offsets = [0, 5, 0], sizes = [2, 1, 32], strides = [1, 1, 1]} : vector<2x64x32xf32> to vector<2x1x32xf32>
    %22 = arith.maximumf %20, %21 : vector<2x1x32xf32>
    %23 = vector.extract_strided_slice %12 {offsets = [0, 6, 0], sizes = [2, 1, 32], strides = [1, 1, 1]} : vector<2x64x32xf32> to vector<2x1x32xf32>
    %24 = arith.maximumf %22, %23 : vector<2x1x32xf32>
    %25 = vector.extract_strided_slice %12 {offsets = [0, 7, 0], sizes = [2, 1, 32], strides = [1, 1, 1]} : vector<2x64x32xf32> to vector<2x1x32xf32>
    %26 = arith.maximumf %24, %25 : vector<2x1x32xf32>
    %27 = vector.extract_strided_slice %12 {offsets = [0, 8, 0], sizes = [2, 1, 32], strides = [1, 1, 1]} : vector<2x64x32xf32> to vector<2x1x32xf32>
    %28 = vector.extract_strided_slice %12 {offsets = [0, 9, 0], sizes = [2, 1, 32], strides = [1, 1, 1]} : vector<2x64x32xf32> to vector<2x1x32xf32>
    %29 = arith.maximumf %27, %28 : vector<2x1x32xf32>
    %30 = vector.extract_strided_slice %12 {offsets = [0, 10, 0], sizes = [2, 1, 32], strides = [1, 1, 1]} : vector<2x64x32xf32> to vector<2x1x32xf32>
    %31 = arith.maximumf %29, %30 : vector<2x1x32xf32>
    %32 = vector.extract_strided_slice %12 {offsets = [0, 11, 0], sizes = [2, 1, 32], strides = [1, 1, 1]} : vector<2x64x32xf32> to vector<2x1x32xf32>
    %33 = arith.maximumf %31, %32 : vector<2x1x32xf32>
    %34 = vector.extract_strided_slice %12 {offsets = [0, 12, 0], sizes = [2, 1, 32], strides = [1, 1, 1]} : vector<2x64x32xf32> to vector<2x1x32xf32>
    %35 = vector.extract_strided_slice %12 {offsets = [0, 13, 0], sizes = [2, 1, 32], strides = [1, 1, 1]} : vector<2x64x32xf32> to vector<2x1x32xf32>
    %36 = arith.maximumf %34, %35 : vector<2x1x32xf32>
    %37 = vector.extract_strided_slice %12 {offsets = [0, 14, 0], sizes = [2, 1, 32], strides = [1, 1, 1]} : vector<2x64x32xf32> to vector<2x1x32xf32>
    %38 = arith.maximumf %36, %37 : vector<2x1x32xf32>
    %39 = vector.extract_strided_slice %12 {offsets = [0, 15, 0], sizes = [2, 1, 32], strides = [1, 1, 1]} : vector<2x64x32xf32> to vector<2x1x32xf32>
    %40 = arith.maximumf %38, %39 : vector<2x1x32xf32>
    %41 = vector.extract_strided_slice %12 {offsets = [0, 16, 0], sizes = [2, 1, 32], strides = [1, 1, 1]} : vector<2x64x32xf32> to vector<2x1x32xf32>
    %42 = vector.extract_strided_slice %12 {offsets = [0, 17, 0], sizes = [2, 1, 32], strides = [1, 1, 1]} : vector<2x64x32xf32> to vector<2x1x32xf32>
    %43 = arith.maximumf %41, %42 : vector<2x1x32xf32>
    %44 = vector.extract_strided_slice %12 {offsets = [0, 18, 0], sizes = [2, 1, 32], strides = [1, 1, 1]} : vector<2x64x32xf32> to vector<2x1x32xf32>
    %45 = arith.maximumf %43, %44 : vector<2x1x32xf32>
    %46 = vector.extract_strided_slice %12 {offsets = [0, 19, 0], sizes = [2, 1, 32], strides = [1, 1, 1]} : vector<2x64x32xf32> to vector<2x1x32xf32>
    %47 = arith.maximumf %45, %46 : vector<2x1x32xf32>
    %48 = vector.extract_strided_slice %12 {offsets = [0, 20, 0], sizes = [2, 1, 32], strides = [1, 1, 1]} : vector<2x64x32xf32> to vector<2x1x32xf32>
    %49 = vector.extract_strided_slice %12 {offsets = [0, 21, 0], sizes = [2, 1, 32], strides = [1, 1, 1]} : vector<2x64x32xf32> to vector<2x1x32xf32>
    %50 = arith.maximumf %48, %49 : vector<2x1x32xf32>
    %51 = vector.extract_strided_slice %12 {offsets = [0, 22, 0], sizes = [2, 1, 32], strides = [1, 1, 1]} : vector<2x64x32xf32> to vector<2x1x32xf32>
    %52 = arith.maximumf %50, %51 : vector<2x1x32xf32>
    %53 = vector.extract_strided_slice %12 {offsets = [0, 23, 0], sizes = [2, 1, 32], strides = [1, 1, 1]} : vector<2x64x32xf32> to vector<2x1x32xf32>
    %54 = arith.maximumf %52, %53 : vector<2x1x32xf32>
    %55 = vector.extract_strided_slice %12 {offsets = [0, 24, 0], sizes = [2, 1, 32], strides = [1, 1, 1]} : vector<2x64x32xf32> to vector<2x1x32xf32>
    %56 = vector.extract_strided_slice %12 {offsets = [0, 25, 0], sizes = [2, 1, 32], strides = [1, 1, 1]} : vector<2x64x32xf32> to vector<2x1x32xf32>
    %57 = arith.maximumf %55, %56 : vector<2x1x32xf32>
    %58 = vector.extract_strided_slice %12 {offsets = [0, 26, 0], sizes = [2, 1, 32], strides = [1, 1, 1]} : vector<2x64x32xf32> to vector<2x1x32xf32>
    %59 = arith.maximumf %57, %58 : vector<2x1x32xf32>
    %60 = vector.extract_strided_slice %12 {offsets = [0, 27, 0], sizes = [2, 1, 32], strides = [1, 1, 1]} : vector<2x64x32xf32> to vector<2x1x32xf32>
    %61 = arith.maximumf %59, %60 : vector<2x1x32xf32>
    %62 = vector.extract_strided_slice %12 {offsets = [0, 28, 0], sizes = [2, 1, 32], strides = [1, 1, 1]} : vector<2x64x32xf32> to vector<2x1x32xf32>
    %63 = vector.extract_strided_slice %12 {offsets = [0, 29, 0], sizes = [2, 1, 32], strides = [1, 1, 1]} : vector<2x64x32xf32> to vector<2x1x32xf32>
    %64 = arith.maximumf %62, %63 : vector<2x1x32xf32>
    %65 = vector.extract_strided_slice %12 {offsets = [0, 30, 0], sizes = [2, 1, 32], strides = [1, 1, 1]} : vector<2x64x32xf32> to vector<2x1x32xf32>
    %66 = arith.maximumf %64, %65 : vector<2x1x32xf32>
    %67 = vector.extract_strided_slice %12 {offsets = [0, 31, 0], sizes = [2, 1, 32], strides = [1, 1, 1]} : vector<2x64x32xf32> to vector<2x1x32xf32>
    %68 = arith.maximumf %66, %67 : vector<2x1x32xf32>
    %69 = vector.extract_strided_slice %12 {offsets = [0, 32, 0], sizes = [2, 1, 32], strides = [1, 1, 1]} : vector<2x64x32xf32> to vector<2x1x32xf32>
    %70 = vector.extract_strided_slice %12 {offsets = [0, 33, 0], sizes = [2, 1, 32], strides = [1, 1, 1]} : vector<2x64x32xf32> to vector<2x1x32xf32>
    %71 = arith.maximumf %69, %70 : vector<2x1x32xf32>
    %72 = vector.extract_strided_slice %12 {offsets = [0, 34, 0], sizes = [2, 1, 32], strides = [1, 1, 1]} : vector<2x64x32xf32> to vector<2x1x32xf32>
    %73 = arith.maximumf %71, %72 : vector<2x1x32xf32>
    %74 = vector.extract_strided_slice %12 {offsets = [0, 35, 0], sizes = [2, 1, 32], strides = [1, 1, 1]} : vector<2x64x32xf32> to vector<2x1x32xf32>
    %75 = arith.maximumf %73, %74 : vector<2x1x32xf32>
    %76 = vector.extract_strided_slice %12 {offsets = [0, 36, 0], sizes = [2, 1, 32], strides = [1, 1, 1]} : vector<2x64x32xf32> to vector<2x1x32xf32>
    %77 = vector.extract_strided_slice %12 {offsets = [0, 37, 0], sizes = [2, 1, 32], strides = [1, 1, 1]} : vector<2x64x32xf32> to vector<2x1x32xf32>
    %78 = arith.maximumf %76, %77 : vector<2x1x32xf32>
    %79 = vector.extract_strided_slice %12 {offsets = [0, 38, 0], sizes = [2, 1, 32], strides = [1, 1, 1]} : vector<2x64x32xf32> to vector<2x1x32xf32>
    %80 = arith.maximumf %78, %79 : vector<2x1x32xf32>
    %81 = vector.extract_strided_slice %12 {offsets = [0, 39, 0], sizes = [2, 1, 32], strides = [1, 1, 1]} : vector<2x64x32xf32> to vector<2x1x32xf32>
    %82 = arith.maximumf %80, %81 : vector<2x1x32xf32>
    %83 = vector.extract_strided_slice %12 {offsets = [0, 40, 0], sizes = [2, 1, 32], strides = [1, 1, 1]} : vector<2x64x32xf32> to vector<2x1x32xf32>
    %84 = vector.extract_strided_slice %12 {offsets = [0, 41, 0], sizes = [2, 1, 32], strides = [1, 1, 1]} : vector<2x64x32xf32> to vector<2x1x32xf32>
    %85 = arith.maximumf %83, %84 : vector<2x1x32xf32>
    %86 = vector.extract_strided_slice %12 {offsets = [0, 42, 0], sizes = [2, 1, 32], strides = [1, 1, 1]} : vector<2x64x32xf32> to vector<2x1x32xf32>
    %87 = arith.maximumf %85, %86 : vector<2x1x32xf32>
    %88 = vector.extract_strided_slice %12 {offsets = [0, 43, 0], sizes = [2, 1, 32], strides = [1, 1, 1]} : vector<2x64x32xf32> to vector<2x1x32xf32>
    %89 = arith.maximumf %87, %88 : vector<2x1x32xf32>
    %90 = vector.extract_strided_slice %12 {offsets = [0, 44, 0], sizes = [2, 1, 32], strides = [1, 1, 1]} : vector<2x64x32xf32> to vector<2x1x32xf32>
    %91 = vector.extract_strided_slice %12 {offsets = [0, 45, 0], sizes = [2, 1, 32], strides = [1, 1, 1]} : vector<2x64x32xf32> to vector<2x1x32xf32>
    %92 = arith.maximumf %90, %91 : vector<2x1x32xf32>
    %93 = vector.extract_strided_slice %12 {offsets = [0, 46, 0], sizes = [2, 1, 32], strides = [1, 1, 1]} : vector<2x64x32xf32> to vector<2x1x32xf32>
    %94 = arith.maximumf %92, %93 : vector<2x1x32xf32>
    %95 = vector.extract_strided_slice %12 {offsets = [0, 47, 0], sizes = [2, 1, 32], strides = [1, 1, 1]} : vector<2x64x32xf32> to vector<2x1x32xf32>
    %96 = arith.maximumf %94, %95 : vector<2x1x32xf32>
    %97 = vector.extract_strided_slice %12 {offsets = [0, 48, 0], sizes = [2, 1, 32], strides = [1, 1, 1]} : vector<2x64x32xf32> to vector<2x1x32xf32>
    %98 = vector.extract_strided_slice %12 {offsets = [0, 49, 0], sizes = [2, 1, 32], strides = [1, 1, 1]} : vector<2x64x32xf32> to vector<2x1x32xf32>
    %99 = arith.maximumf %97, %98 : vector<2x1x32xf32>
    %100 = vector.extract_strided_slice %12 {offsets = [0, 50, 0], sizes = [2, 1, 32], strides = [1, 1, 1]} : vector<2x64x32xf32> to vector<2x1x32xf32>
    %101 = arith.maximumf %99, %100 : vector<2x1x32xf32>
    %102 = vector.extract_strided_slice %12 {offsets = [0, 51, 0], sizes = [2, 1, 32], strides = [1, 1, 1]} : vector<2x64x32xf32> to vector<2x1x32xf32>
    %103 = arith.maximumf %101, %102 : vector<2x1x32xf32>
    %104 = vector.extract_strided_slice %12 {offsets = [0, 52, 0], sizes = [2, 1, 32], strides = [1, 1, 1]} : vector<2x64x32xf32> to vector<2x1x32xf32>
    %105 = vector.extract_strided_slice %12 {offsets = [0, 53, 0], sizes = [2, 1, 32], strides = [1, 1, 1]} : vector<2x64x32xf32> to vector<2x1x32xf32>
    %106 = arith.maximumf %104, %105 : vector<2x1x32xf32>
    %107 = vector.extract_strided_slice %12 {offsets = [0, 54, 0], sizes = [2, 1, 32], strides = [1, 1, 1]} : vector<2x64x32xf32> to vector<2x1x32xf32>
    %108 = arith.maximumf %106, %107 : vector<2x1x32xf32>
    %109 = vector.extract_strided_slice %12 {offsets = [0, 55, 0], sizes = [2, 1, 32], strides = [1, 1, 1]} : vector<2x64x32xf32> to vector<2x1x32xf32>
    %110 = arith.maximumf %108, %109 : vector<2x1x32xf32>
    %111 = vector.extract_strided_slice %12 {offsets = [0, 56, 0], sizes = [2, 1, 32], strides = [1, 1, 1]} : vector<2x64x32xf32> to vector<2x1x32xf32>
    %112 = vector.extract_strided_slice %12 {offsets = [0, 57, 0], sizes = [2, 1, 32], strides = [1, 1, 1]} : vector<2x64x32xf32> to vector<2x1x32xf32>
    %113 = arith.maximumf %111, %112 : vector<2x1x32xf32>
    %114 = vector.extract_strided_slice %12 {offsets = [0, 58, 0], sizes = [2, 1, 32], strides = [1, 1, 1]} : vector<2x64x32xf32> to vector<2x1x32xf32>
    %115 = arith.maximumf %113, %114 : vector<2x1x32xf32>
    %116 = vector.extract_strided_slice %12 {offsets = [0, 59, 0], sizes = [2, 1, 32], strides = [1, 1, 1]} : vector<2x64x32xf32> to vector<2x1x32xf32>
    %117 = arith.maximumf %115, %116 : vector<2x1x32xf32>
    %118 = vector.extract_strided_slice %12 {offsets = [0, 60, 0], sizes = [2, 1, 32], strides = [1, 1, 1]} : vector<2x64x32xf32> to vector<2x1x32xf32>
    %119 = vector.extract_strided_slice %12 {offsets = [0, 61, 0], sizes = [2, 1, 32], strides = [1, 1, 1]} : vector<2x64x32xf32> to vector<2x1x32xf32>
    %120 = arith.maximumf %118, %119 : vector<2x1x32xf32>
    %121 = vector.extract_strided_slice %12 {offsets = [0, 62, 0], sizes = [2, 1, 32], strides = [1, 1, 1]} : vector<2x64x32xf32> to vector<2x1x32xf32>
    %122 = arith.maximumf %120, %121 : vector<2x1x32xf32>
    %123 = vector.extract_strided_slice %12 {offsets = [0, 63, 0], sizes = [2, 1, 32], strides = [1, 1, 1]} : vector<2x64x32xf32> to vector<2x1x32xf32>
    %124 = arith.maximumf %122, %123 : vector<2x1x32xf32>
    %125 = tpu.concatenate %19, %26, %33, %40, %47, %54, %61, %68, %75, %82, %89, %96, %103, %110, %117, %124 in 1 : vector<2x1x32xf32>, vector<2x1x32xf32>, vector<2x1x32xf32>, vector<2x1x32xf32>, vector<2x1x32xf32>, vector<2x1x32xf32>, vector<2x1x32xf32>, vector<2x1x32xf32>, vector<2x1x32xf32>, vector<2x1x32xf32>, vector<2x1x32xf32>, vector<2x1x32xf32>, vector<2x1x32xf32>, vector<2x1x32xf32>, vector<2x1x32xf32>, vector<2x1x32xf32> -> vector<2x16x32xf32>
    %c0_18 = arith.constant 0 : index
    %c0_19 = arith.constant 0 : index
    %126 = vector.load %arg3[%c0_18, %c0_19] : memref<1x32xf32, #tpu.memory_space<vmem>>, vector<1x32xf32>
    %127 = vector.shape_cast %126 : vector<1x32xf32> to vector<1x1x32xf32>
    %128 = vector.broadcast %127 : vector<1x1x32xf32> to vector<2x16x32xf32>
    %129 = arith.mulf %125, %128 : vector<2x16x32xf32>
    %c0_20 = arith.constant 0 : index
    %c0_21 = arith.constant 0 : index
    %130 = vector.load %arg4[%c0_20, %c0_21] : memref<1x32xf32, #tpu.memory_space<vmem>>, vector<1x32xf32>
    %131 = vector.shape_cast %130 : vector<1x32xf32> to vector<1x1x32xf32>
    %132 = vector.broadcast %131 : vector<1x1x32xf32> to vector<2x16x32xf32>
    %133 = arith.addf %129, %132 : vector<2x16x32xf32>
    %134 = vector.extract_strided_slice %133 {offsets = [0, 0, 0], sizes = [2, 9, 32], strides = [1, 1, 1]} : vector<2x16x32xf32> to vector<2x9x32xf32>
    %135 = vector.extract_strided_slice %133 {offsets = [0, 1, 0], sizes = [2, 9, 32], strides = [1, 1, 1]} : vector<2x16x32xf32> to vector<2x9x32xf32>
    %136 = vector.extract_strided_slice %133 {offsets = [0, 2, 0], sizes = [2, 9, 32], strides = [1, 1, 1]} : vector<2x16x32xf32> to vector<2x9x32xf32>
    %137 = vector.extract_strided_slice %133 {offsets = [0, 3, 0], sizes = [2, 9, 32], strides = [1, 1, 1]} : vector<2x16x32xf32> to vector<2x9x32xf32>
    %138 = vector.extract_strided_slice %133 {offsets = [0, 4, 0], sizes = [2, 9, 32], strides = [1, 1, 1]} : vector<2x16x32xf32> to vector<2x9x32xf32>
    %139 = vector.extract_strided_slice %133 {offsets = [0, 5, 0], sizes = [2, 9, 32], strides = [1, 1, 1]} : vector<2x16x32xf32> to vector<2x9x32xf32>
    %140 = vector.extract_strided_slice %133 {offsets = [0, 6, 0], sizes = [2, 9, 32], strides = [1, 1, 1]} : vector<2x16x32xf32> to vector<2x9x32xf32>
    %141 = vector.extract_strided_slice %133 {offsets = [0, 7, 0], sizes = [2, 9, 32], strides = [1, 1, 1]} : vector<2x16x32xf32> to vector<2x9x32xf32>
    %142 = tpu.concatenate %134, %135, %136, %137, %138, %139, %140, %141 in 2 : vector<2x9x32xf32>, vector<2x9x32xf32>, vector<2x9x32xf32>, vector<2x9x32xf32>, vector<2x9x32xf32>, vector<2x9x32xf32>, vector<2x9x32xf32>, vector<2x9x32xf32> -> vector<2x9x256xf32>
    %c0_22 = arith.constant 0 : index
    %c0_23 = arith.constant 0 : index
    %143 = vector.load %arg5[%c0_22, %c0_23] : memref<256x32xf32, #tpu.memory_space<vmem>>, vector<256x32xf32>
    %144 = vector.shape_cast %143 : vector<256x32xf32> to vector<1x256x32xf32>
    %145 = vector.broadcast %144 : vector<1x256x32xf32> to vector<2x256x32xf32>
    "tpu.trace_start"() <{level = 10 : i32, message = "blk,bko->blo"}> : () -> ()
    %cst_24 = arith.constant dense<0.000000e+00> : vector<2x9x32xf32>
    %146 = tpu.matmul %142, %145, %cst_24 {dimension_numbers = #tpu.dot_dimension_numbers<[2], [1], [1], [2], [0, 0, 0, 1, 1, 2], [0], [0]>} : vector<2x9x256xf32>, vector<2x256x32xf32>, vector<2x9x32xf32> -> vector<2x9x32xf32>
    "tpu.trace_stop"() : () -> ()
    %147 = vector.extract_strided_slice %146 {offsets = [0, 0, 0], sizes = [2, 1, 32], strides = [1, 1, 1]} : vector<2x9x32xf32> to vector<2x1x32xf32>
    %148 = vector.extract_strided_slice %146 {offsets = [0, 1, 0], sizes = [2, 1, 32], strides = [1, 1, 1]} : vector<2x9x32xf32> to vector<2x1x32xf32>
    %149 = arith.maximumf %147, %148 : vector<2x1x32xf32>
    %150 = vector.extract_strided_slice %146 {offsets = [0, 2, 0], sizes = [2, 1, 32], strides = [1, 1, 1]} : vector<2x9x32xf32> to vector<2x1x32xf32>
    %151 = arith.maximumf %149, %150 : vector<2x1x32xf32>
    %152 = vector.extract_strided_slice %146 {offsets = [0, 3, 0], sizes = [2, 1, 32], strides = [1, 1, 1]} : vector<2x9x32xf32> to vector<2x1x32xf32>
    %153 = arith.maximumf %151, %152 : vector<2x1x32xf32>
    %154 = vector.extract_strided_slice %146 {offsets = [0, 4, 0], sizes = [2, 1, 32], strides = [1, 1, 1]} : vector<2x9x32xf32> to vector<2x1x32xf32>
    %155 = vector.extract_strided_slice %146 {offsets = [0, 5, 0], sizes = [2, 1, 32], strides = [1, 1, 1]} : vector<2x9x32xf32> to vector<2x1x32xf32>
    %156 = arith.maximumf %154, %155 : vector<2x1x32xf32>
    %157 = vector.extract_strided_slice %146 {offsets = [0, 6, 0], sizes = [2, 1, 32], strides = [1, 1, 1]} : vector<2x9x32xf32> to vector<2x1x32xf32>
    %158 = arith.maximumf %156, %157 : vector<2x1x32xf32>
    %159 = vector.extract_strided_slice %146 {offsets = [0, 7, 0], sizes = [2, 1, 32], strides = [1, 1, 1]} : vector<2x9x32xf32> to vector<2x1x32xf32>
    %160 = arith.maximumf %158, %159 : vector<2x1x32xf32>
    %161 = tpu.concatenate %153, %160 in 1 : vector<2x1x32xf32>, vector<2x1x32xf32> -> vector<2x2x32xf32>
    %c0_25 = arith.constant 0 : index
    %c0_26 = arith.constant 0 : index
    %162 = vector.load %arg6[%c0_25, %c0_26] : memref<1x32xf32, #tpu.memory_space<vmem>>, vector<1x32xf32>
    %163 = vector.shape_cast %162 : vector<1x32xf32> to vector<1x1x32xf32>
    %164 = vector.broadcast %163 : vector<1x1x32xf32> to vector<2x2x32xf32>
    %165 = arith.mulf %161, %164 : vector<2x2x32xf32>
    %c0_27 = arith.constant 0 : index
    %c0_28 = arith.constant 0 : index
    %166 = vector.load %arg7[%c0_27, %c0_28] : memref<1x32xf32, #tpu.memory_space<vmem>>, vector<1x32xf32>
    %167 = vector.shape_cast %166 : vector<1x32xf32> to vector<1x1x32xf32>
    %168 = vector.broadcast %167 : vector<1x1x32xf32> to vector<2x2x32xf32>
    %169 = arith.addf %165, %168 : vector<2x2x32xf32>
    %c0_29 = arith.constant 0 : index
    %c0_30 = arith.constant 0 : index
    %c0_31 = arith.constant 0 : index
    %170 = vector.load %arg13[%c0_29, %c0_30, %c0_31] : memref<2x2x32xf32, #tpu.memory_space<vmem>>, vector<2x2x32xf32>
    tpu.vector_store %arg13[%c0_29, %c0_30, %c0_31], %169 {strides = array<i32>} : memref<2x2x32xf32, #tpu.memory_space<vmem>>, vector<2x2x32xf32>,
    %171 = vector.extract_strided_slice %169 {offsets = [0, 0, 0], sizes = [2, 1, 32], strides = [1, 1, 1]} : vector<2x2x32xf32> to vector<2x1x32xf32>
    %172 = vector.extract_strided_slice %169 {offsets = [0, 1, 0], sizes = [2, 1, 32], strides = [1, 1, 1]} : vector<2x2x32xf32> to vector<2x1x32xf32>
    %173 = tpu.concatenate %171, %172 in 2 : vector<2x1x32xf32>, vector<2x1x32xf32> -> vector<2x1x64xf32>
    %c0_32 = arith.constant 0 : index
    %c0_33 = arith.constant 0 : index
    %174 = vector.load %arg8[%c0_32, %c0_33] : memref<64x64xf32, #tpu.memory_space<vmem>>, vector<64x64xf32>
    %175 = vector.shape_cast %174 : vector<64x64xf32> to vector<1x64x64xf32>
    %176 = vector.broadcast %175 : vector<1x64x64xf32> to vector<2x64x64xf32>
    "tpu.trace_start"() <{level = 10 : i32, message = "bif,bfh->bih"}> : () -> ()
    %cst_34 = arith.constant dense<0.000000e+00> : vector<2x1x64xf32>
    %177 = tpu.matmul %173, %176, %cst_34 {dimension_numbers = #tpu.dot_dimension_numbers<[2], [1], [1], [2], [0, 0, 0, 1, 1, 2], [0], [0]>} : vector<2x1x64xf32>, vector<2x64x64xf32>, vector<2x1x64xf32> -> vector<2x1x64xf32>
    "tpu.trace_stop"() : () -> ()
    %c0_35 = arith.constant 0 : index
    %c0_36 = arith.constant 0 : index
    %178 = vector.load %arg9[%c0_35, %c0_36] : memref<1x64xf32, #tpu.memory_space<vmem>>, vector<1x64xf32>
    %179 = vector.shape_cast %178 : vector<1x64xf32> to vector<1x1x64xf32>
    %180 = vector.broadcast %179 : vector<1x1x64xf32> to vector<2x1x64xf32>
    %181 = arith.addf %177, %180 : vector<2x1x64xf32>
    %182 = math.tanh %181 : vector<2x1x64xf32>
    %c0_37 = arith.constant 0 : index
    %c0_38 = arith.constant 0 : index
    %183 = vector.load %arg10[%c0_37, %c0_38] : memref<64x4xf32, #tpu.memory_space<vmem>>, vector<64x4xf32>
    %184 = vector.shape_cast %183 : vector<64x4xf32> to vector<1x64x4xf32>
    %185 = vector.broadcast %184 : vector<1x64x4xf32> to vector<2x64x4xf32>
    "tpu.trace_start"() <{level = 10 : i32, message = "bih,bho->bio"}> : () -> ()
    %cst_39 = arith.constant dense<0.000000e+00> : vector<2x1x4xf32>
    %186 = tpu.matmul %182, %185, %cst_39 {dimension_numbers = #tpu.dot_dimension_numbers<[2], [1], [1], [2], [0, 0, 0, 1, 1, 2], [0], [0]>} : vector<2x1x64xf32>, vector<2x64x4xf32>, vector<2x1x4xf32> -> vector<2x1x4xf32>
    "tpu.trace_stop"() : () -> ()
    %c0_40 = arith.constant 0 : index
    %c0_41 = arith.constant 0 : index
    %187 = vector.load %arg11[%c0_40, %c0_41] : memref<1x4xf32, #tpu.memory_space<vmem>>, vector<1x4xf32>
    %188 = vector.shape_cast %187 : vector<1x4xf32> to vector<1x1x4xf32>
    %189 = vector.broadcast %188 : vector<1x1x4xf32> to vector<2x1x4xf32>
    %190 = arith.addf %186, %189 : vector<2x1x4xf32>
    %c0_42 = arith.constant 0 : index
    %c0_43 = arith.constant 0 : index
    %c0_44 = arith.constant 0 : index
    %191 = vector.load %arg12[%c0_42, %c0_43, %c0_44] : memref<2x1x4xf32, #tpu.memory_space<vmem>>, vector<2x1x4xf32>
    tpu.vector_store %arg12[%c0_42, %c0_43, %c0_44], %190 {strides = array<i32>} : memref<2x1x4xf32, #tpu.memory_space<vmem>>, vector<2x1x4xf32>,
    return
  }
  func.func @transform_0(%arg0: i32) -> (i32, i32, i32) {
    %c0_i32 = arith.constant 0 : i32
    %c0_i32_0 = arith.constant 0 : i32
    %c0_i32_1 = arith.constant 0 : i32
    return %arg0, %c0_i32, %c0_i32_0 : i32, i32, i32
  }
  func.func @transform_1(%arg0: i32) -> (i32, i32) {
    %c0_i32 = arith.constant 0 : i32
    %c0_i32_0 = arith.constant 0 : i32
    %c0_i32_1 = arith.constant 0 : i32
    return %c0_i32, %c0_i32_0 : i32, i32
  }
  func.func @transform_2(%arg0: i32) -> (i32, i32) {
    %c0_i32 = arith.constant 0 : i32
    %c0_i32_0 = arith.constant 0 : i32
    %c0_i32_1 = arith.constant 0 : i32
    return %c0_i32, %c0_i32_0 : i32, i32
  }
  func.func @transform_3(%arg0: i32) -> (i32, i32) {
    %c0_i32 = arith.constant 0 : i32
    %c0_i32_0 = arith.constant 0 : i32
    %c0_i32_1 = arith.constant 0 : i32
    return %c0_i32, %c0_i32_0 : i32, i32
  }
  func.func @transform_4(%arg0: i32) -> (i32, i32) {
    %c0_i32 = arith.constant 0 : i32
    %c0_i32_0 = arith.constant 0 : i32
    %c0_i32_1 = arith.constant 0 : i32
    return %c0_i32, %c0_i32_0 : i32, i32
  }
  func.func @transform_5(%arg0: i32) -> (i32, i32) {
    %c0_i32 = arith.constant 0 : i32
    %c0_i32_0 = arith.constant 0 : i32
    %c0_i32_1 = arith.constant 0 : i32
    return %c0_i32, %c0_i32_0 : i32, i32
  }
  func.func @transform_6(%arg0: i32) -> (i32, i32) {
    %c0_i32 = arith.constant 0 : i32
    %c0_i32_0 = arith.constant 0 : i32
    %c0_i32_1 = arith.constant 0 : i32
    return %c0_i32, %c0_i32_0 : i32, i32
  }
  func.func @transform_7(%arg0: i32) -> (i32, i32) {
    %c0_i32 = arith.constant 0 : i32
    %c0_i32_0 = arith.constant 0 : i32
    %c0_i32_1 = arith.constant 0 : i32
    return %c0_i32, %c0_i32_0 : i32, i32
  }
  func.func @transform_8(%arg0: i32) -> (i32, i32) {
    %c0_i32 = arith.constant 0 : i32
    %c0_i32_0 = arith.constant 0 : i32
    %c0_i32_1 = arith.constant 0 : i32
    return %c0_i32, %c0_i32_0 : i32, i32
  }
  func.func @transform_9(%arg0: i32) -> (i32, i32) {
    %c0_i32 = arith.constant 0 : i32
    %c0_i32_0 = arith.constant 0 : i32
    %c0_i32_1 = arith.constant 0 : i32
    return %c0_i32, %c0_i32_0 : i32, i32
  }
  func.func @transform_10(%arg0: i32) -> (i32, i32) {
    %c0_i32 = arith.constant 0 : i32
    %c0_i32_0 = arith.constant 0 : i32
    %c0_i32_1 = arith.constant 0 : i32
    return %c0_i32, %c0_i32_0 : i32, i32
  }
  func.func @transform_11(%arg0: i32) -> (i32, i32, i32) {
    %c0_i32 = arith.constant 0 : i32
    %c0_i32_0 = arith.constant 0 : i32
    %c0_i32_1 = arith.constant 0 : i32
    return %arg0, %c0_i32, %c0_i32_0 : i32, i32, i32
  }
  func.func @transform_12(%arg0: i32) -> (i32, i32, i32) {
    %c0_i32 = arith.constant 0 : i32
    %c0_i32_0 = arith.constant 0 : i32
    %c0_i32_1 = arith.constant 0 : i32
    return %arg0, %c0_i32, %c0_i32_0 : i32, i32, i32
  }
}

</mosaic_0001>

<llo_original>
// kernel: _lambda_.1
$region0: #{_lambda_.1}
  #allocation0 [shape = 'u32[]', space=smem, size = 0x4, offset = 0x4, fixed_abs, tag = 'smem constant byte address 0x4 - core index']
  #allocation1 [shape = 'u32[144,128]{1,0:T(1,128)}', space=vmem, size = 0x12000, scoped, tag = 'internal scratch']
  %s0 = inlined_call_operand.vmem [shape: f32[4,71,8], index: 0, kind: input, shape index: {}]
  %s1 = inlined_call_operand.vmem [shape: f32[64,32], index: 1, kind: input, shape index: {}]
  %s2 = inlined_call_operand.vmem [shape: f32[1,32], index: 2, kind: input, shape index: {}]
  %s3 = inlined_call_operand.vmem [shape: f32[1,32], index: 3, kind: input, shape index: {}]
  %s4 = inlined_call_operand.vmem [shape: f32[256,32], index: 4, kind: input, shape index: {}]
  %s5 = inlined_call_operand.vmem [shape: f32[1,32], index: 5, kind: input, shape index: {}]
  %s6 = inlined_call_operand.vmem [shape: f32[1,32], index: 6, kind: input, shape index: {}]
  %s7 = inlined_call_operand.vmem [shape: f32[64,64], index: 7, kind: input, shape index: {}]
  %s8 = inlined_call_operand.vmem [shape: f32[1,64], index: 8, kind: input, shape index: {}]
  %s9 = inlined_call_operand.vmem [shape: f32[64,4], index: 9, kind: input, shape index: {}]
  %s10 = inlined_call_operand.vmem [shape: f32[1,4], index: 10, kind: input, shape index: {}]
  %s11 = inlined_call_operand.hbm [shape: f32[4,1,4], index: 11, kind: output, shape index: {0}]
  %s12 = inlined_call_operand.vmem [shape: f32[4,2,32], index: 12, kind: output, shape index: {1}]
  %13 = xla_tuple %s11, %s12
  %s14 = sld [smem:[#allocation0]]
  $region85: #{_lambda_.1} parent=0
    _
  %s16 = ssub.s32 1, %s14
  %s17 = scalar_select 0, %s16, %s14
  $region1: #{_lambda_.1} parent=0
    #allocation2 [shape = 'u8[2048]{0}', space=vmem, size = 0x800, scoped, tag = 'output window, operand 0']
    #allocation3 [shape = 's32[2]{0}', space=sflag, size = 0x8, scoped, tag = 'scoped memory for _lambda_.1']
    %18 = vsyncpa [#allocation3], 0
    %s19 = scalar_lea.sflag [#allocation3], 1
    %20 = vsyncpa %s19, 0
    loop: start=0, step=1, limit=4
    $region2: #{_lambda_.1} parent=1 // loop_pre_header
      _
    $region3: #{_lambda_.1} parent=1 // loop_header
      %s22 = sphi 0, %s26
      %p23 = scmp.ge.s32.totalorder %s22, 4
      %s32 = sphi 0, %s34
      %s35 = sphi 0, %s32
      %s36 = sphi 0, %s35
      %s52 = sphi 0, %s36
      %s56 = sphi 0, %s56
      %s58 = sphi 0, %s56
      %s59 = sphi 0, %s58
      %s73 = sphi 0, %s59
      %s77 = sphi 0, %s77
      %s79 = sphi 0, %s77
      %s80 = sphi 0, %s79
      %s94 = sphi 0, %s80
      %s98 = sphi 0, %s98
      %s100 = sphi 0, %s98
      %s101 = sphi 0, %s100
      %s115 = sphi 0, %s101
      %s119 = sphi 0, %s119
      %s121 = sphi 0, %s119
      %s122 = sphi 0, %s121
      %s136 = sphi 0, %s122
      %s140 = sphi 0, %s140
      %s142 = sphi 0, %s140
      %s143 = sphi 0, %s142
      %s157 = sphi 0, %s143
      %s161 = sphi 0, %s161
      %s163 = sphi 0, %s161
      %s164 = sphi 0, %s163
      %s178 = sphi 0, %s164
      %s182 = sphi 0, %s182
      %s184 = sphi 0, %s182
      %s185 = sphi 0, %s184
      %s199 = sphi 0, %s185
      %s203 = sphi 0, %s203
      %s205 = sphi 0, %s203
      %s206 = sphi 0, %s205
      %s220 = sphi 0, %s206
      %s224 = sphi 0, %s224
      %s226 = sphi 0, %s224
      %s227 = sphi 0, %s226
      %s241 = sphi 0, %s227
      %s245 = sphi 0, %s245
      %s247 = sphi 0, %s245
      %s248 = sphi 0, %s247
      %s262 = sphi 0, %s248
      %s268 = sphi 0, %s270
      %s271 = sphi 0, %s268
      %s272 = sphi 0, %s271
      %s288 = sphi 0, %s272
      %s294 = sphi 0, %s296
      %s297 = sphi 0, %s294
      %s298 = sphi 0, %s297
      %s314 = sphi 0, %s298
    $region4: #{_lambda_.1} parent=1 // loop_header_branch
      %25 = sbr.rel (%p23) target = $region8
    $region5: #{_lambda_.1} parent=1 // loop_body
      %s27 = ssub.s32 %s22, 1
      %s28 = ssub.s32 %s22, 2
      %s29 = sadd.s32 %s22, 1
      %s30 = ssub.s32 %s22, %s29
      %p31 = scmp.eq.s32.totalorder %s30, 0
      %s33 = sadd.s32 %s32, 1
      %s34 = scalar_select %p31, %s32, %s33
      %p37 = pneg %p31
      %p38 = scmp.eq.s32.totalorder %s22, 1
      %p39 = por %p37, %p38
      %p40 = scmp.ne.s32.totalorder %s32, %s35
      %p41 = scmp.eq.s32.totalorder %s22, 0
      %p42 = por %p40, %p41
      %p43 = scmp.ne.s32.totalorder %s32, %s35
      %p44 = scmp.eq.s32.totalorder %s27, 1
      %p45 = por %p43, %p44
      %p46 = scmp.ne.s32.totalorder %s35, %s36
      %p47 = scmp.eq.s32.totalorder %s27, 0
      %p48 = por %p46, %p47
      %p49 = scmp.ne.s32.totalorder %s35, %s36
      %p50 = scmp.eq.s32.totalorder %s28, 1
      %p51 = por %p49, %p50
      %p53 = scmp.ne.s32.totalorder %s36, %s52
      %p54 = scmp.eq.s32.totalorder %s28, 0
      %p55 = por %p53, %p54
      %s57 = sadd.s32 %s56, 1
      %p60 = scmp.eq.s32.totalorder %s22, 1
      %p61 = scmp.ne.s32.totalorder %s56, %s58
      %p62 = scmp.eq.s32.totalorder %s22, 0
      %p63 = por %p61, %p62
      %p64 = scmp.ne.s32.totalorder %s56, %s58
      %p65 = scmp.eq.s32.totalorder %s27, 1
      %p66 = por %p64, %p65
      %p67 = scmp.ne.s32.totalorder %s58, %s59
      %p68 = scmp.eq.s32.totalorder %s27, 0
      %p69 = por %p67, %p68
      %p70 = scmp.ne.s32.totalorder %s58, %s59
      %p71 = scmp.eq.s32.totalorder %s28, 1
      %p72 = por %p70, %p71
      %p74 = scmp.ne.s32.totalorder %s59, %s73
      %p75 = scmp.eq.s32.totalorder %s28, 0
      %p76 = por %p74, %p75
      %s78 = sadd.s32 %s77, 1
      %p81 = scmp.eq.s32.totalorder %s22, 1
      %p82 = scmp.ne.s32.totalorder %s77, %s79
      %p83 = scmp.eq.s32.totalorder %s22, 0
      %p84 = por %p82, %p83
      %p85 = scmp.ne.s32.totalorder %s77, %s79
      %p86 = scmp.eq.s32.totalorder %s27, 1
      %p87 = por %p85, %p86
      %p88 = scmp.ne.s32.totalorder %s79, %s80
      %p89 = scmp.eq.s32.totalorder %s27, 0
      %p90 = por %p88, %p89
      %p91 = scmp.ne.s32.totalorder %s79, %s80
      %p92 = scmp.eq.s32.totalorder %s28, 1
      %p93 = por %p91, %p92
      %p95 = scmp.ne.s32.totalorder %s80, %s94
      %p96 = scmp.eq.s32.totalorder %s28, 0
      %p97 = por %p95, %p96
      %s99 = sadd.s32 %s98, 1
      %p102 = scmp.eq.s32.totalorder %s22, 1
      %p103 = scmp.ne.s32.totalorder %s98, %s100
      %p104 = scmp.eq.s32.totalorder %s22, 0
      %p105 = por %p103, %p104
      %p106 = scmp.ne.s32.totalorder %s98, %s100
      %p107 = scmp.eq.s32.totalorder %s27, 1
      %p108 = por %p106, %p107
      %p109 = scmp.ne.s32.totalorder %s100, %s101
      %p110 = scmp.eq.s32.totalorder %s27, 0
      %p111 = por %p109, %p110
      %p112 = scmp.ne.s32.totalorder %s100, %s101
      %p113 = scmp.eq.s32.totalorder %s28, 1
      %p114 = por %p112, %p113
      %p116 = scmp.ne.s32.totalorder %s101, %s115
      %p117 = scmp.eq.s32.totalorder %s28, 0
      %p118 = por %p116, %p117
      %s120 = sadd.s32 %s119, 1
      %p123 = scmp.eq.s32.totalorder %s22, 1
      %p124 = scmp.ne.s32.totalorder %s119, %s121
      %p125 = scmp.eq.s32.totalorder %s22, 0
      %p126 = por %p124, %p125
      %p127 = scmp.ne.s32.totalorder %s119, %s121
      %p128 = scmp.eq.s32.totalorder %s27, 1
      %p129 = por %p127, %p128
      %p130 = scmp.ne.s32.totalorder %s121, %s122
      %p131 = scmp.eq.s32.totalorder %s27, 0
      %p132 = por %p130, %p131
      %p133 = scmp.ne.s32.totalorder %s121, %s122
      %p134 = scmp.eq.s32.totalorder %s28, 1
      %p135 = por %p133, %p134
      %p137 = scmp.ne.s32.totalorder %s122, %s136
      %p138 = scmp.eq.s32.totalorder %s28, 0
      %p139 = por %p137, %p138
      %s141 = sadd.s32 %s140, 1
      %p144 = scmp.eq.s32.totalorder %s22, 1
      %p145 = scmp.ne.s32.totalorder %s140, %s142
      %p146 = scmp.eq.s32.totalorder %s22, 0
      %p147 = por %p145, %p146
      %p148 = scmp.ne.s32.totalorder %s140, %s142
      %p149 = scmp.eq.s32.totalorder %s27, 1
      %p150 = por %p148, %p149
      %p151 = scmp.ne.s32.totalorder %s142, %s143
      %p152 = scmp.eq.s32.totalorder %s27, 0
      %p153 = por %p151, %p152
      %p154 = scmp.ne.s32.totalorder %s142, %s143
      %p155 = scmp.eq.s32.totalorder %s28, 1
      %p156 = por %p154, %p155
      %p158 = scmp.ne.s32.totalorder %s143, %s157
      %p159 = scmp.eq.s32.totalorder %s28, 0
      %p160 = por %p158, %p159
      %s162 = sadd.s32 %s161, 1
      %p165 = scmp.eq.s32.totalorder %s22, 1
      %p166 = scmp.ne.s32.totalorder %s161, %s163
      %p167 = scmp.eq.s32.totalorder %s22, 0
      %p168 = por %p166, %p167
      %p169 = scmp.ne.s32.totalorder %s161, %s163
      %p170 = scmp.eq.s32.totalorder %s27, 1
      %p171 = por %p169, %p170
      %p172 = scmp.ne.s32.totalorder %s163, %s164
      %p173 = scmp.eq.s32.totalorder %s27, 0
      %p174 = por %p172, %p173
      %p175 = scmp.ne.s32.totalorder %s163, %s164
      %p176 = scmp.eq.s32.totalorder %s28, 1
      %p177 = por %p175, %p176
      %p179 = scmp.ne.s32.totalorder %s164, %s178
      %p180 = scmp.eq.s32.totalorder %s28, 0
      %p181 = por %p179, %p180
      %s183 = sadd.s32 %s182, 1
      %p186 = scmp.eq.s32.totalorder %s22, 1
      %p187 = scmp.ne.s32.totalorder %s182, %s184
      %p188 = scmp.eq.s32.totalorder %s22, 0
      %p189 = por %p187, %p188
      %p190 = scmp.ne.s32.totalorder %s182, %s184
      %p191 = scmp.eq.s32.totalorder %s27, 1
      %p192 = por %p190, %p191
      %p193 = scmp.ne.s32.totalorder %s184, %s185
      %p194 = scmp.eq.s32.totalorder %s27, 0
      %p195 = por %p193, %p194
      %p196 = scmp.ne.s32.totalorder %s184, %s185
      %p197 = scmp.eq.s32.totalorder %s28, 1
      %p198 = por %p196, %p197
      %p200 = scmp.ne.s32.totalorder %s185, %s199
      %p201 = scmp.eq.s32.totalorder %s28, 0
      %p202 = por %p200, %p201
      %s204 = sadd.s32 %s203, 1
      %p207 = scmp.eq.s32.totalorder %s22, 1
      %p208 = scmp.ne.s32.totalorder %s203, %s205
      %p209 = scmp.eq.s32.totalorder %s22, 0
      %p210 = por %p208, %p209
      %p211 = scmp.ne.s32.totalorder %s203, %s205
      %p212 = scmp.eq.s32.totalorder %s27, 1
      %p213 = por %p211, %p212
      %p214 = scmp.ne.s32.totalorder %s205, %s206
      %p215 = scmp.eq.s32.totalorder %s27, 0
      %p216 = por %p214, %p215
      %p217 = scmp.ne.s32.totalorder %s205, %s206
      %p218 = scmp.eq.s32.totalorder %s28, 1
      %p219 = por %p217, %p218
      %p221 = scmp.ne.s32.totalorder %s206, %s220
      %p222 = scmp.eq.s32.totalorder %s28, 0
      %p223 = por %p221, %p222
      %s225 = sadd.s32 %s224, 1
      %p228 = scmp.eq.s32.totalorder %s22, 1
      %p229 = scmp.ne.s32.totalorder %s224, %s226
      %p230 = scmp.eq.s32.totalorder %s22, 0
      %p231 = por %p229, %p230
      %p232 = scmp.ne.s32.totalorder %s224, %s226
      %p233 = scmp.eq.s32.totalorder %s27, 1
      %p234 = por %p232, %p233
      %p235 = scmp.ne.s32.totalorder %s226, %s227
      %p236 = scmp.eq.s32.totalorder %s27, 0
      %p237 = por %p235, %p236
      %p238 = scmp.ne.s32.totalorder %s226, %s227
      %p239 = scmp.eq.s32.totalorder %s28, 1
      %p240 = por %p238, %p239
      %p242 = scmp.ne.s32.totalorder %s227, %s241
      %p243 = scmp.eq.s32.totalorder %s28, 0
      %p244 = por %p242, %p243
      %s246 = sadd.s32 %s245, 1
      %p249 = scmp.eq.s32.totalorder %s22, 1
      %p250 = scmp.ne.s32.totalorder %s245, %s247
      %p251 = scmp.eq.s32.totalorder %s22, 0
      %p252 = por %p250, %p251
      %p253 = scmp.ne.s32.totalorder %s245, %s247
      %p254 = scmp.eq.s32.totalorder %s27, 1
      %p255 = por %p253, %p254
      %p256 = scmp.ne.s32.totalorder %s247, %s248
      %p257 = scmp.eq.s32.totalorder %s27, 0
      %p258 = por %p256, %p257
      %p259 = scmp.ne.s32.totalorder %s247, %s248
      %p260 = scmp.eq.s32.totalorder %s28, 1
      %p261 = por %p259, %p260
      %p263 = scmp.ne.s32.totalorder %s248, %s262
      %p264 = scmp.eq.s32.totalorder %s28, 0
      %p265 = por %p263, %p264
      %s266 = ssub.s32 %s22, %s29
      %p267 = scmp.eq.s32.totalorder %s266, 0
      %s269 = sadd.s32 %s268, 1
      %s270 = scalar_select %p267, %s268, %s269
      %p273 = pneg %p267
      %p274 = scmp.eq.s32.totalorder %s22, 1
      %p275 = por %p273, %p274
      %p276 = scmp.ne.s32.totalorder %s268, %s271
      %p277 = scmp.eq.s32.totalorder %s22, 0
      %p278 = por %p276, %p277
      %p279 = scmp.ne.s32.totalorder %s268, %s271
      %p280 = scmp.eq.s32.totalorder %s27, 1
      %p281 = por %p279, %p280
      %p282 = scmp.ne.s32.totalorder %s271, %s272
      %p283 = scmp.eq.s32.totalorder %s27, 0
      %p284 = por %p282, %p283
      %p285 = scmp.ne.s32.totalorder %s271, %s272
      %p286 = scmp.eq.s32.totalorder %s28, 1
      %p287 = por %p285, %p286
      %p289 = scmp.ne.s32.totalorder %s272, %s288
      %p290 = scmp.eq.s32.totalorder %s28, 0
      %p291 = por %p289, %p290
      %s292 = ssub.s32 %s22, %s29
      %p293 = scmp.eq.s32.totalorder %s292, 0
      %s295 = sadd.s32 %s294, 1
      %s296 = scalar_select %p293, %s294, %s295
      %p299 = pneg %p293
      %p300 = scmp.eq.s32.totalorder %s22, 1
      %p301 = por %p299, %p300
      %p302 = scmp.ne.s32.totalorder %s294, %s297
      %p303 = scmp.eq.s32.totalorder %s22, 0
      %p304 = por %p302, %p303
      %p305 = scmp.ne.s32.totalorder %s294, %s297
      %p306 = scmp.eq.s32.totalorder %s27, 1
      %p307 = por %p305, %p306
      %p308 = scmp.ne.s32.totalorder %s297, %s298
      %p309 = scmp.eq.s32.totalorder %s27, 0
      %p310 = por %p308, %p309
      %p311 = scmp.ne.s32.totalorder %s297, %s298
      %p312 = scmp.eq.s32.totalorder %s28, 1
      %p313 = por %p311, %p312
      %p315 = scmp.ne.s32.totalorder %s298, %s314
      %p316 = scmp.eq.s32.totalorder %s28, 0
      %p317 = por %p315, %p316
      %p318 = scmp.le.s32.totalorder 1, %s22
      %p319 = scmp.lt.s32.totalorder %s22, 3
      %p320 = pnand %p318, %p319
      %p321 = pneg %p320
      // Predicated region
      $region9: #{_lambda_.1} parent=5 // pred_check
        _
      $region10: #{_lambda_.1} parent=5 // pred_check_branch
        %323 = sbr.rel (%p320) target = $region12
      $region11: #{_lambda_.1} parent=5 // pred_region
        %s324 = ssub.s32 %s22, 1
        // Predicated region
        $region13: #{_lambda_.1} parent=11 // pred_check
          %p325 = pneg %p69
        $region14: #{_lambda_.1} parent=11 // pred_check_branch
          %327 = sbr.rel (%p325) target = $region16
        $region15: #{_lambda_.1} parent=11 // pred_region
          _
        $region16: #{_lambda_.1} parent=11 // pred_fallthru
          _
        // Predicated region
        $region17: #{_lambda_.1} parent=11 // pred_check
          %p328 = pneg %p90
        $region18: #{_lambda_.1} parent=11 // pred_check_branch
          %330 = sbr.rel (%p328) target = $region20
        $region19: #{_lambda_.1} parent=11 // pred_region
          _
        $region20: #{_lambda_.1} parent=11 // pred_fallthru
          _
        // Predicated region
        $region21: #{_lambda_.1} parent=11 // pred_check
          %p331 = pneg %p111
        $region22: #{_lambda_.1} parent=11 // pred_check_branch
          %333 = sbr.rel (%p331) target = $region24
        $region23: #{_lambda_.1} parent=11 // pred_region
          _
        $region24: #{_lambda_.1} parent=11 // pred_fallthru
          _
        // Predicated region
        $region25: #{_lambda_.1} parent=11 // pred_check
          %p334 = pneg %p132
        $region26: #{_lambda_.1} parent=11 // pred_check_branch
          %336 = sbr.rel (%p334) target = $region28
        $region27: #{_lambda_.1} parent=11 // pred_region
          _
        $region28: #{_lambda_.1} parent=11 // pred_fallthru
          _
        // Predicated region
        $region29: #{_lambda_.1} parent=11 // pred_check
          %p337 = pneg %p153
        $region30: #{_lambda_.1} parent=11 // pred_check_branch
          %339 = sbr.rel (%p337) target = $region32
        $region31: #{_lambda_.1} parent=11 // pred_region
          _
        $region32: #{_lambda_.1} parent=11 // pred_fallthru
          _
        // Predicated region
        $region33: #{_lambda_.1} parent=11 // pred_check
          %p340 = pneg %p174
        $region34: #{_lambda_.1} parent=11 // pred_check_branch
          %342 = sbr.rel (%p340) target = $region36
        $region35: #{_lambda_.1} parent=11 // pred_region
          _
        $region36: #{_lambda_.1} parent=11 // pred_fallthru
          _
        // Predicated region
        $region37: #{_lambda_.1} parent=11 // pred_check
          %p343 = pneg %p195
        $region38: #{_lambda_.1} parent=11 // pred_check_branch
          %345 = sbr.rel (%p343) target = $region40
        $region39: #{_lambda_.1} parent=11 // pred_region
          _
        $region40: #{_lambda_.1} parent=11 // pred_fallthru
          _
        // Predicated region
        $region41: #{_lambda_.1} parent=11 // pred_check
          %p346 = pneg %p216
        $region42: #{_lambda_.1} parent=11 // pred_check_branch
          %348 = sbr.rel (%p346) target = $region44
        $region43: #{_lambda_.1} parent=11 // pred_region
          _
        $region44: #{_lambda_.1} parent=11 // pred_fallthru
          _
        // Predicated region
        $region45: #{_lambda_.1} parent=11 // pred_check
          %p349 = pneg %p237
        $region46: #{_lambda_.1} parent=11 // pred_check_branch
          %351 = sbr.rel (%p349) target = $region48
        $region47: #{_lambda_.1} parent=11 // pred_region
          _
        $region48: #{_lambda_.1} parent=11 // pred_fallthru
          _
        // Predicated region
        $region49: #{_lambda_.1} parent=11 // pred_check
          %p352 = pneg %p258
        $region50: #{_lambda_.1} parent=11 // pred_check_branch
          %354 = sbr.rel (%p352) target = $region52
        $region51: #{_lambda_.1} parent=11 // pred_region
          _
        $region52: #{_lambda_.1} parent=11 // pred_fallthru
          _
      $region12: #{_lambda_.1} parent=5 // pred_fallthru
        _
      %p355 = scmp.lt.s32.totalorder %s22, 2
      // Predicated region
      $region53: #{_lambda_.1} parent=5 // pred_check
        %p356 = pneg %p355
      $region54: #{_lambda_.1} parent=5 // pred_check_branch
        %358 = sbr.rel (%p356) target = $region56
      $region55: #{_lambda_.1} parent=5 // pred_region
        // Predicated region
        $region57: #{_lambda_.1} parent=55 // pred_check
          %p359 = pneg %p42
        $region58: #{_lambda_.1} parent=55 // pred_check_branch
          %361 = sbr.rel (%p359) target = $region60
        $region59: #{_lambda_.1} parent=55 // pred_region
          %s362 = smul.u32 2, %s22
          %p363 = scmp.lt.s32.totalorder %s362, 3
          %s364 = scalar_select %p363, %s362, 3
          %s365 = smul.addr %s364, 9
          %s366 = smul.addr %s365, 8
          %s367 = scalar_lea.vmem %s0, %s366
          %s368 = smul.u32 2, %s22
        $region60: #{_lambda_.1} parent=55 // pred_fallthru
          _
      $region56: #{_lambda_.1} parent=5 // pred_fallthru
        _
      %p369 = scmp.le.s32.totalorder 1, %s22
      %p370 = scmp.lt.s32.totalorder %s22, 3
      %p371 = pnand %p369, %p370
      %p372 = pneg %p371
      // Predicated region
      $region61: #{_lambda_.1} parent=5 // pred_check
        _
      $region62: #{_lambda_.1} parent=5 // pred_check_branch
        %374 = sbr.rel (%p371) target = $region64
      $region63: #{_lambda_.1} parent=5 // pred_region
        %s375 = ssub.s32 %s22, 1
        %s376 = smul.u32 2, %s27
        %p377 = scmp.lt.s32.totalorder %s376, 3
        %s378 = scalar_select %p377, %s376, 3
        %s379 = smul.addr %s378, 9
        %s380 = smul.addr %s379, 8
        %s381 = scalar_lea.vmem %s0, %s380
        %p382 = pneg %p48
        %p383 = pneg %p45
        %p384 = pneg %p69
        %p385 = pneg %p66
        %p386 = pneg %p90
        %p387 = pneg %p87
        %p388 = pneg %p111
        %p389 = pneg %p108
        %p390 = pneg %p132
        %p391 = pneg %p129
        %p392 = pneg %p153
        %p393 = pneg %p150
        %p394 = pneg %p174
        %p395 = pneg %p171
        %p396 = pneg %p195
        %p397 = pneg %p192
        %p398 = pneg %p216
        %p399 = pneg %p213
        %p400 = pneg %p237
        %p401 = pneg %p234
        %p402 = pneg %p258
        %p403 = pneg %p255
        %p404 = pneg %p284
        %p405 = pneg %p281
        %s406 = sand.u32 %s271, 1
        %s407 = scalar_lea.sflag [#allocation3], %s406
        %s408 = sand.u32 %s271, 1
        %s409 = smul.addr %s408, 2
        %s410 = scalar_lea.vmem [#allocation2], %s409
        %p411 = pneg %p310
        %p412 = pneg %p307
        %s413 = smul.u32 2, %s27
        %p414 = scmp.lt.s32.totalorder %s413, 3
        %s415 = scalar_select %p414, %s413, 3
        %s416 = smul.addr %s415, 2
        %s417 = scalar_lea.vmem %s12, %s416
        %s418 = smul.u32 2, %s27
        %p419 = scmp.lt.s32.totalorder %s418, 3
        %s420 = scalar_select %p419, %s418, 3
        %s421 = smul.addr %s420, 9
        %s422 = smul.addr %s421, 8
        %s423 = scalar_lea.vmem %s0, %s422
        %s424 = smul.u32 2, %s27
        %s425 = smul.u32 2, %s27
        %s426 = smul.u32 2, %s27
        %p427 = scmp.lt.s32.totalorder %s426, 3
        %s428 = scalar_select %p427, %s426, 3
        %s429 = smul.addr %s428, 2
        %s430 = scalar_lea.vmem %s12, %s429
        %s431 = smul.u32 2, %s27
        %v432 = vld [vmem:[%s423] sm:$0xff]
        %v433 = vld [vmem:[%s423 + $0x8] sm:$0xff]
        %v434 = vld [vmem:[%s423 + $0x10] sm:$0xff]
        %v435 = vld [vmem:[%s423 + $0x18] sm:$0xff]
        %v436 = vld [vmem:[%s423 + $0x20] sm:$0xff]
        %v437 = vld [vmem:[%s423 + $0x28] sm:$0xff]
        %v438 = vld [vmem:[%s423 + $0x30] sm:$0xff]
        %v439 = vld [vmem:[%s423 + $0x38] sm:$0xff]
        %v440 = vld [vmem:[%s423 + $0x48] sm:$0xff]
        %v441 = vld [vmem:[%s423 + $0x50] sm:$0xff]
        %v442 = vld [vmem:[%s423 + $0x58] sm:$0xff]
        %v443 = vld [vmem:[%s423 + $0x60] sm:$0xff]
        %v444 = vld [vmem:[%s423 + $0x68] sm:$0xff]
        %v445 = vld [vmem:[%s423 + $0x70] sm:$0xff]
        %v446 = vld [vmem:[%s423 + $0x78] sm:$0xff]
        %v447 = vld [vmem:[%s423 + $0x80] sm:$0xff]
        %v448 = vld [vmem:[%s423 + $0x1] sm:$0xff]
        %v449 = vld [vmem:[%s423 + $0x9] sm:$0xff]
        %v450 = vld [vmem:[%s423 + $0x11] sm:$0xff]
        %v451 = vld [vmem:[%s423 + $0x19] sm:$0xff]
        %v452 = vld [vmem:[%s423 + $0x21] sm:$0xff]
        %v453 = vld [vmem:[%s423 + $0x29] sm:$0xff]
        %v454 = vld [vmem:[%s423 + $0x31] sm:$0xff]
        %v455 = vld [vmem:[%s423 + $0x39] sm:$0xff]
        %v456 = vld [vmem:[%s423 + $0x49] sm:$0xff]
        %v457 = vld [vmem:[%s423 + $0x51] sm:$0xff]
        %v458 = vld [vmem:[%s423 + $0x59] sm:$0xff]
        %v459 = vld [vmem:[%s423 + $0x61] sm:$0xff]
        %v460 = vld [vmem:[%s423 + $0x69] sm:$0xff]
        %v461 = vld [vmem:[%s423 + $0x71] sm:$0xff]
        %v462 = vld [vmem:[%s423 + $0x79] sm:$0xff]
        %v463 = vld [vmem:[%s423 + $0x81] sm:$0xff]
        %v464 = vld [vmem:[%s423 + $0x2] sm:$0xff]
        %v465 = vld [vmem:[%s423 + $0xa] sm:$0xff]
        %v466 = vld [vmem:[%s423 + $0x12] sm:$0xff]
        %v467 = vld [vmem:[%s423 + $0x1a] sm:$0xff]
        %v468 = vld [vmem:[%s423 + $0x22] sm:$0xff]
        %v469 = vld [vmem:[%s423 + $0x2a] sm:$0xff]
        %v470 = vld [vmem:[%s423 + $0x32] sm:$0xff]
        %v471 = vld [vmem:[%s423 + $0x3a] sm:$0xff]
        %v472 = vld [vmem:[%s423 + $0x4a] sm:$0xff]
        %v473 = vld [vmem:[%s423 + $0x52] sm:$0xff]
        %v474 = vld [vmem:[%s423 + $0x5a] sm:$0xff]
        %v475 = vld [vmem:[%s423 + $0x62] sm:$0xff]
        %v476 = vld [vmem:[%s423 + $0x6a] sm:$0xff]
        %v477 = vld [vmem:[%s423 + $0x72] sm:$0xff]
        %v478 = vld [vmem:[%s423 + $0x7a] sm:$0xff]
        %v479 = vld [vmem:[%s423 + $0x82] sm:$0xff]
        %v480 = vld [vmem:[%s423 + $0x3] sm:$0xff]
        %v481 = vld [vmem:[%s423 + $0xb] sm:$0xff]
        %v482 = vld [vmem:[%s423 + $0x13] sm:$0xff]
        %v483 = vld [vmem:[%s423 + $0x1b] sm:$0xff]
        %v484 = vld [vmem:[%s423 + $0x23] sm:$0xff]
        %v485 = vld [vmem:[%s423 + $0x2b] sm:$0xff]
        %v486 = vld [vmem:[%s423 + $0x33] sm:$0xff]
        %v487 = vld [vmem:[%s423 + $0x3b] sm:$0xff]
        %v488 = vld [vmem:[%s423 + $0x4b] sm:$0xff]
        %v489 = vld [vmem:[%s423 + $0x53] sm:$0xff]
        %v490 = vld [vmem:[%s423 + $0x5b] sm:$0xff]
        %v491 = vld [vmem:[%s423 + $0x63] sm:$0xff]
        %v492 = vld [vmem:[%s423 + $0x6b] sm:$0xff]
        %v493 = vld [vmem:[%s423 + $0x73] sm:$0xff]
        %v494 = vld [vmem:[%s423 + $0x7b] sm:$0xff]
        %v495 = vld [vmem:[%s423 + $0x83] sm:$0xff]
        %v496 = vld [vmem:[%s423 + $0x4] sm:$0xff]
        %v497 = vld [vmem:[%s423 + $0xc] sm:$0xff]
        %v498 = vld [vmem:[%s423 + $0x14] sm:$0xff]
        %v499 = vld [vmem:[%s423 + $0x1c] sm:$0xff]
        %v500 = vld [vmem:[%s423 + $0x24] sm:$0xff]
        %v501 = vld [vmem:[%s423 + $0x2c] sm:$0xff]
        %v502 = vld [vmem:[%s423 + $0x34] sm:$0xff]
        %v503 = vld [vmem:[%s423 + $0x3c] sm:$0xff]
        %v504 = vld [vmem:[%s423 + $0x4c] sm:$0xff]
        %v505 = vld [vmem:[%s423 + $0x54] sm:$0xff]
        %v506 = vld [vmem:[%s423 + $0x5c] sm:$0xff]
        %v507 = vld [vmem:[%s423 + $0x64] sm:$0xff]
        %v508 = vld [vmem:[%s423 + $0x6c] sm:$0xff]
        %v509 = vld [vmem:[%s423 + $0x74] sm:$0xff]
        %v510 = vld [vmem:[%s423 + $0x7c] sm:$0xff]
        %v511 = vld [vmem:[%s423 + $0x84] sm:$0xff]
        %v512 = vld [vmem:[%s423 + $0x5] sm:$0xff]
        %v513 = vld [vmem:[%s423 + $0xd] sm:$0xff]
        %v514 = vld [vmem:[%s423 + $0x15] sm:$0xff]
        %v515 = vld [vmem:[%s423 + $0x1d] sm:$0xff]
        %v516 = vld [vmem:[%s423 + $0x25] sm:$0xff]
        %v517 = vld [vmem:[%s423 + $0x2d] sm:$0xff]
        %v518 = vld [vmem:[%s423 + $0x35] sm:$0xff]
        %v519 = vld [vmem:[%s423 + $0x3d] sm:$0xff]
        %v520 = vld [vmem:[%s423 + $0x4d] sm:$0xff]
        %v521 = vld [vmem:[%s423 + $0x55] sm:$0xff]
        %v522 = vld [vmem:[%s423 + $0x5d] sm:$0xff]
        %v523 = vld [vmem:[%s423 + $0x65] sm:$0xff]
        %v524 = vld [vmem:[%s423 + $0x6d] sm:$0xff]
        %v525 = vld [vmem:[%s423 + $0x75] sm:$0xff]
        %v526 = vld [vmem:[%s423 + $0x7d] sm:$0xff]
        %v527 = vld [vmem:[%s423 + $0x85] sm:$0xff]
        %v528 = vld [vmem:[%s423 + $0x6] sm:$0xff]
        %v529 = vld [vmem:[%s423 + $0xe] sm:$0xff]
        %v530 = vld [vmem:[%s423 + $0x16] sm:$0xff]
        %v531 = vld [vmem:[%s423 + $0x1e] sm:$0xff]
        %v532 = vld [vmem:[%s423 + $0x26] sm:$0xff]
        %v533 = vld [vmem:[%s423 + $0x2e] sm:$0xff]
        %v534 = vld [vmem:[%s423 + $0x36] sm:$0xff]
        %v535 = vld [vmem:[%s423 + $0x3e] sm:$0xff]
        %v536 = vld [vmem:[%s423 + $0x4e] sm:$0xff]
        %v537 = vld [vmem:[%s423 + $0x56] sm:$0xff]
        %v538 = vld [vmem:[%s423 + $0x5e] sm:$0xff]
        %v539 = vld [vmem:[%s423 + $0x66] sm:$0xff]
        %v540 = vld [vmem:[%s423 + $0x6e] sm:$0xff]
        %v541 = vld [vmem:[%s423 + $0x76] sm:$0xff]
        %v542 = vld [vmem:[%s423 + $0x7e] sm:$0xff]
        %v543 = vld [vmem:[%s423 + $0x86] sm:$0xff]
        %v544 = vld [vmem:[%s423 + $0x7] sm:$0xff]
        %v545 = vld [vmem:[%s423 + $0xf] sm:$0xff]
        %v546 = vld [vmem:[%s423 + $0x17] sm:$0xff]
        %v547 = vld [vmem:[%s423 + $0x1f] sm:$0xff]
        %v548 = vld [vmem:[%s423 + $0x27] sm:$0xff]
        %v549 = vld [vmem:[%s423 + $0x2f] sm:$0xff]
        %v550 = vld [vmem:[%s423 + $0x37] sm:$0xff]
        %v551 = vld [vmem:[%s423 + $0x3f] sm:$0xff]
        %v552 = vld [vmem:[%s423 + $0x4f] sm:$0xff]
        %v553 = vld [vmem:[%s423 + $0x57] sm:$0xff]
        %v554 = vld [vmem:[%s423 + $0x5f] sm:$0xff]
        %v555 = vld [vmem:[%s423 + $0x67] sm:$0xff]
        %v556 = vld [vmem:[%s423 + $0x6f] sm:$0xff]
        %v557 = vld [vmem:[%s423 + $0x77] sm:$0xff]
        %v558 = vld [vmem:[%s423 + $0x7f] sm:$0xff]
        %v559 = vld [vmem:[%s423 + $0x87] sm:$0xff]
        %576 = vrot.lane.b32.xlu0 %v448, 8
        %v577 = vpop.permute.xlu0 %576
        %578 = vrot.lane.b32.xlu0 %v449, 8
        %v579 = vpop.permute.xlu0 %578
        %580 = vrot.lane.b32.xlu0 %v450, 8
        %v581 = vpop.permute.xlu0 %580
        %582 = vrot.lane.b32.xlu0 %v451, 8
        %v583 = vpop.permute.xlu0 %582
        %584 = vrot.lane.b32.xlu0 %v452, 8
        %v585 = vpop.permute.xlu0 %584
        %586 = vrot.lane.b32.xlu0 %v453, 8
        %v587 = vpop.permute.xlu0 %586
        %588 = vrot.lane.b32.xlu0 %v454, 8
        %v589 = vpop.permute.xlu0 %588
        %590 = vrot.lane.b32.xlu0 %v455, 8
        %v591 = vpop.permute.xlu0 %590
        %592 = vrot.lane.b32.xlu0 %v456, 8
        %v593 = vpop.permute.xlu0 %592
        %594 = vrot.lane.b32.xlu0 %v457, 8
        %v595 = vpop.permute.xlu0 %594
        %596 = vrot.lane.b32.xlu0 %v458, 8
        %v597 = vpop.permute.xlu0 %596
        %598 = vrot.lane.b32.xlu0 %v459, 8
        %v599 = vpop.permute.xlu0 %598
        %600 = vrot.lane.b32.xlu0 %v460, 8
        %v601 = vpop.permute.xlu0 %600
        %602 = vrot.lane.b32.xlu0 %v461, 8
        %v603 = vpop.permute.xlu0 %602
        %604 = vrot.lane.b32.xlu0 %v462, 8
        %v605 = vpop.permute.xlu0 %604
        %606 = vrot.lane.b32.xlu0 %v463, 8
        %v607 = vpop.permute.xlu0 %606
        %640 = vrot.lane.b32.xlu0 %v464, 16
        %v641 = vpop.permute.xlu0 %640
        %642 = vrot.lane.b32.xlu0 %v465, 16
        %v643 = vpop.permute.xlu0 %642
        %644 = vrot.lane.b32.xlu0 %v466, 16
        %v645 = vpop.permute.xlu0 %644
        %646 = vrot.lane.b32.xlu0 %v467, 16
        %v647 = vpop.permute.xlu0 %646
        %648 = vrot.lane.b32.xlu0 %v468, 16
        %v649 = vpop.permute.xlu0 %648
        %650 = vrot.lane.b32.xlu0 %v469, 16
        %v651 = vpop.permute.xlu0 %650
        %652 = vrot.lane.b32.xlu0 %v470, 16
        %v653 = vpop.permute.xlu0 %652
        %654 = vrot.lane.b32.xlu0 %v471, 16
        %v655 = vpop.permute.xlu0 %654
        %656 = vrot.lane.b32.xlu0 %v472, 16
        %v657 = vpop.permute.xlu0 %656
        %658 = vrot.lane.b32.xlu0 %v473, 16
        %v659 = vpop.permute.xlu0 %658
        %660 = vrot.lane.b32.xlu0 %v474, 16
        %v661 = vpop.permute.xlu0 %660
        %662 = vrot.lane.b32.xlu0 %v475, 16
        %v663 = vpop.permute.xlu0 %662
        %664 = vrot.lane.b32.xlu0 %v476, 16
        %v665 = vpop.permute.xlu0 %664
        %666 = vrot.lane.b32.xlu0 %v477, 16
        %v667 = vpop.permute.xlu0 %666
        %668 = vrot.lane.b32.xlu0 %v478, 16
        %v669 = vpop.permute.xlu0 %668
        %670 = vrot.lane.b32.xlu0 %v479, 16
        %v671 = vpop.permute.xlu0 %670
        %704 = vrot.lane.b32.xlu0 %v480, 24
        %v705 = vpop.permute.xlu0 %704
        %706 = vrot.lane.b32.xlu0 %v481, 24
        %v707 = vpop.permute.xlu0 %706
        %708 = vrot.lane.b32.xlu0 %v482, 24
        %v709 = vpop.permute.xlu0 %708
        %710 = vrot.lane.b32.xlu0 %v483, 24
        %v711 = vpop.permute.xlu0 %710
        %712 = vrot.lane.b32.xlu0 %v484, 24
        %v713 = vpop.permute.xlu0 %712
        %714 = vrot.lane.b32.xlu0 %v485, 24
        %v715 = vpop.permute.xlu0 %714
        %716 = vrot.lane.b32.xlu0 %v486, 24
        %v717 = vpop.permute.xlu0 %716
        %718 = vrot.lane.b32.xlu0 %v487, 24
        %v719 = vpop.permute.xlu0 %718
        %720 = vrot.lane.b32.xlu0 %v488, 24
        %v721 = vpop.permute.xlu0 %720
        %722 = vrot.lane.b32.xlu0 %v489, 24
        %v723 = vpop.permute.xlu0 %722
        %724 = vrot.lane.b32.xlu0 %v490, 24
        %v725 = vpop.permute.xlu0 %724
        %726 = vrot.lane.b32.xlu0 %v491, 24
        %v727 = vpop.permute.xlu0 %726
        %728 = vrot.lane.b32.xlu0 %v492, 24
        %v729 = vpop.permute.xlu0 %728
        %730 = vrot.lane.b32.xlu0 %v493, 24
        %v731 = vpop.permute.xlu0 %730
        %732 = vrot.lane.b32.xlu0 %v494, 24
        %v733 = vpop.permute.xlu0 %732
        %734 = vrot.lane.b32.xlu0 %v495, 24
        %v735 = vpop.permute.xlu0 %734
        %768 = vrot.lane.b32.xlu0 %v496, 32
        %v769 = vpop.permute.xlu0 %768
        %770 = vrot.lane.b32.xlu0 %v497, 32
        %v771 = vpop.permute.xlu0 %770
        %772 = vrot.lane.b32.xlu0 %v498, 32
        %v773 = vpop.permute.xlu0 %772
        %774 = vrot.lane.b32.xlu0 %v499, 32
        %v775 = vpop.permute.xlu0 %774
        %776 = vrot.lane.b32.xlu0 %v500, 32
        %v777 = vpop.permute.xlu0 %776
        %778 = vrot.lane.b32.xlu0 %v501, 32
        %v779 = vpop.permute.xlu0 %778
        %780 = vrot.lane.b32.xlu0 %v502, 32
        %v781 = vpop.permute.xlu0 %780
        %782 = vrot.lane.b32.xlu0 %v503, 32
        %v783 = vpop.permute.xlu0 %782
        %784 = vrot.lane.b32.xlu0 %v504, 32
        %v785 = vpop.permute.xlu0 %784
        %786 = vrot.lane.b32.xlu0 %v505, 32
        %v787 = vpop.permute.xlu0 %786
        %788 = vrot.lane.b32.xlu0 %v506, 32
        %v789 = vpop.permute.xlu0 %788
        %790 = vrot.lane.b32.xlu0 %v507, 32
        %v791 = vpop.permute.xlu0 %790
        %792 = vrot.lane.b32.xlu0 %v508, 32
        %v793 = vpop.permute.xlu0 %792
        %794 = vrot.lane.b32.xlu0 %v509, 32
        %v795 = vpop.permute.xlu0 %794
        %796 = vrot.lane.b32.xlu0 %v510, 32
        %v797 = vpop.permute.xlu0 %796
        %798 = vrot.lane.b32.xlu0 %v511, 32
        %v799 = vpop.permute.xlu0 %798
        %832 = vrot.lane.b32.xlu0 %v512, 40
        %v833 = vpop.permute.xlu0 %832
        %834 = vrot.lane.b32.xlu0 %v513, 40
        %v835 = vpop.permute.xlu0 %834
        %836 = vrot.lane.b32.xlu0 %v514, 40
        %v837 = vpop.permute.xlu0 %836
        %838 = vrot.lane.b32.xlu0 %v515, 40
        %v839 = vpop.permute.xlu0 %838
        %840 = vrot.lane.b32.xlu0 %v516, 40
        %v841 = vpop.permute.xlu0 %840
        %842 = vrot.lane.b32.xlu0 %v517, 40
        %v843 = vpop.permute.xlu0 %842
        %844 = vrot.lane.b32.xlu0 %v518, 40
        %v845 = vpop.permute.xlu0 %844
        %846 = vrot.lane.b32.xlu0 %v519, 40
        %v847 = vpop.permute.xlu0 %846
        %848 = vrot.lane.b32.xlu0 %v520, 40
        %v849 = vpop.permute.xlu0 %848
        %850 = vrot.lane.b32.xlu0 %v521, 40
        %v851 = vpop.permute.xlu0 %850
        %852 = vrot.lane.b32.xlu0 %v522, 40
        %v853 = vpop.permute.xlu0 %852
        %854 = vrot.lane.b32.xlu0 %v523, 40
        %v855 = vpop.permute.xlu0 %854
        %856 = vrot.lane.b32.xlu0 %v524, 40
        %v857 = vpop.permute.xlu0 %856
        %858 = vrot.lane.b32.xlu0 %v525, 40
        %v859 = vpop.permute.xlu0 %858
        %860 = vrot.lane.b32.xlu0 %v526, 40
        %v861 = vpop.permute.xlu0 %860
        %862 = vrot.lane.b32.xlu0 %v527, 40
        %v863 = vpop.permute.xlu0 %862
        %896 = vrot.lane.b32.xlu0 %v528, 48
        %v897 = vpop.permute.xlu0 %896
        %898 = vrot.lane.b32.xlu0 %v529, 48
        %v899 = vpop.permute.xlu0 %898
        %900 = vrot.lane.b32.xlu0 %v530, 48
        %v901 = vpop.permute.xlu0 %900
        %902 = vrot.lane.b32.xlu0 %v531, 48
        %v903 = vpop.permute.xlu0 %902
        %904 = vrot.lane.b32.xlu0 %v532, 48
        %v905 = vpop.permute.xlu0 %904
        %906 = vrot.lane.b32.xlu0 %v533, 48
        %v907 = vpop.permute.xlu0 %906
        %908 = vrot.lane.b32.xlu0 %v534, 48
        %v909 = vpop.permute.xlu0 %908
        %910 = vrot.lane.b32.xlu0 %v535, 48
        %v911 = vpop.permute.xlu0 %910
        %912 = vrot.lane.b32.xlu0 %v536, 48
        %v913 = vpop.permute.xlu0 %912
        %914 = vrot.lane.b32.xlu0 %v537, 48
        %v915 = vpop.permute.xlu0 %914
        %916 = vrot.lane.b32.xlu0 %v538, 48
        %v917 = vpop.permute.xlu0 %916
        %918 = vrot.lane.b32.xlu0 %v539, 48
        %v919 = vpop.permute.xlu0 %918
        %920 = vrot.lane.b32.xlu0 %v540, 48
        %v921 = vpop.permute.xlu0 %920
        %922 = vrot.lane.b32.xlu0 %v541, 48
        %v923 = vpop.permute.xlu0 %922
        %924 = vrot.lane.b32.xlu0 %v542, 48
        %v925 = vpop.permute.xlu0 %924
        %926 = vrot.lane.b32.xlu0 %v543, 48
        %v927 = vpop.permute.xlu0 %926
        %960 = vrot.lane.b32.xlu0 %v544, 56
        %v961 = vpop.permute.xlu0 %960
        %962 = vrot.lane.b32.xlu0 %v545, 56
        %v963 = vpop.permute.xlu0 %962
        %964 = vrot.lane.b32.xlu0 %v546, 56
        %v965 = vpop.permute.xlu0 %964
        %966 = vrot.lane.b32.xlu0 %v547, 56
        %v967 = vpop.permute.xlu0 %966
        %968 = vrot.lane.b32.xlu0 %v548, 56
        %v969 = vpop.permute.xlu0 %968
        %970 = vrot.lane.b32.xlu0 %v549, 56
        %v971 = vpop.permute.xlu0 %970
        %972 = vrot.lane.b32.xlu0 %v550, 56
        %v973 = vpop.permute.xlu0 %972
        %974 = vrot.lane.b32.xlu0 %v551, 56
        %v975 = vpop.permute.xlu0 %974
        %976 = vrot.lane.b32.xlu0 %v552, 56
        %v977 = vpop.permute.xlu0 %976
        %978 = vrot.lane.b32.xlu0 %v553, 56
        %v979 = vpop.permute.xlu0 %978
        %980 = vrot.lane.b32.xlu0 %v554, 56
        %v981 = vpop.permute.xlu0 %980
        %982 = vrot.lane.b32.xlu0 %v555, 56
        %v983 = vpop.permute.xlu0 %982
        %984 = vrot.lane.b32.xlu0 %v556, 56
        %v985 = vpop.permute.xlu0 %984
        %986 = vrot.lane.b32.xlu0 %v557, 56
        %v987 = vpop.permute.xlu0 %986
        %988 = vrot.lane.b32.xlu0 %v558, 56
        %v989 = vpop.permute.xlu0 %988
        %990 = vrot.lane.b32.xlu0 %v559, 56
        %v991 = vpop.permute.xlu0 %990
        %vm1008 = vcmask 64512
        %v1009 = vsel %vm1008, %v432, %v577
        %v1010 = vsel %vm1008, %v433, %v579
        %v1011 = vsel %vm1008, %v434, %v581
        %v1012 = vsel %vm1008, %v435, %v583
        %v1013 = vsel %vm1008, %v436, %v585
        %v1014 = vsel %vm1008, %v437, %v587
        %v1015 = vsel %vm1008, %v438, %v589
        %v1016 = vsel %vm1008, %v439, %v591
        %v1017 = vsel %vm1008, %v440, %v593
        %v1018 = vsel %vm1008, %v441, %v595
        %v1019 = vsel %vm1008, %v442, %v597
        %v1020 = vsel %vm1008, %v443, %v599
        %v1021 = vsel %vm1008, %v444, %v601
        %v1022 = vsel %vm1008, %v445, %v603
        %v1023 = vsel %vm1008, %v446, %v605
        %v1024 = vsel %vm1008, %v447, %v607
        %vm1025 = vcmask 130048
        %v1026 = vsel %vm1025, %v1009, %v641
        %v1027 = vsel %vm1025, %v1010, %v643
        %v1028 = vsel %vm1025, %v1011, %v645
        %v1029 = vsel %vm1025, %v1012, %v647
        %v1030 = vsel %vm1025, %v1013, %v649
        %v1031 = vsel %vm1025, %v1014, %v651
        %v1032 = vsel %vm1025, %v1015, %v653
        %v1033 = vsel %vm1025, %v1016, %v655
        %v1034 = vsel %vm1025, %v1017, %v657
        %v1035 = vsel %vm1025, %v1018, %v659
        %v1036 = vsel %vm1025, %v1019, %v661
        %v1037 = vsel %vm1025, %v1020, %v663
        %v1038 = vsel %vm1025, %v1021, %v665
        %v1039 = vsel %vm1025, %v1022, %v667
        %v1040 = vsel %vm1025, %v1023, %v669
        %v1041 = vsel %vm1025, %v1024, %v671
        %vm1042 = vcmask 195584
        %v1043 = vsel %vm1042, %v1026, %v705
        %v1044 = vsel %vm1042, %v1027, %v707
        %v1045 = vsel %vm1042, %v1028, %v709
        %v1046 = vsel %vm1042, %v1029, %v711
        %v1047 = vsel %vm1042, %v1030, %v713
        %v1048 = vsel %vm1042, %v1031, %v715
        %v1049 = vsel %vm1042, %v1032, %v717
        %v1050 = vsel %vm1042, %v1033, %v719
        %v1051 = vsel %vm1042, %v1034, %v721
        %v1052 = vsel %vm1042, %v1035, %v723
        %v1053 = vsel %vm1042, %v1036, %v725
        %v1054 = vsel %vm1042, %v1037, %v727
        %v1055 = vsel %vm1042, %v1038, %v729
        %v1056 = vsel %vm1042, %v1039, %v731
        %v1057 = vsel %vm1042, %v1040, %v733
        %v1058 = vsel %vm1042, %v1041, %v735
        %vm1059 = vcmask 261120
        %v1060 = vsel %vm1059, %v1043, %v769
        %v1061 = vsel %vm1059, %v1044, %v771
        %v1062 = vsel %vm1059, %v1045, %v773
        %v1063 = vsel %vm1059, %v1046, %v775
        %v1064 = vsel %vm1059, %v1047, %v777
        %v1065 = vsel %vm1059, %v1048, %v779
        %v1066 = vsel %vm1059, %v1049, %v781
        %v1067 = vsel %vm1059, %v1050, %v783
        %v1068 = vsel %vm1059, %v1051, %v785
        %v1069 = vsel %vm1059, %v1052, %v787
        %v1070 = vsel %vm1059, %v1053, %v789
        %v1071 = vsel %vm1059, %v1054, %v791
        %v1072 = vsel %vm1059, %v1055, %v793
        %v1073 = vsel %vm1059, %v1056, %v795
        %v1074 = vsel %vm1059, %v1057, %v797
        %v1075 = vsel %vm1059, %v1058, %v799
        %vm1076 = vcmask 326656
        %v1077 = vsel %vm1076, %v1060, %v833
        %v1078 = vsel %vm1076, %v1061, %v835
        %v1079 = vsel %vm1076, %v1062, %v837
        %v1080 = vsel %vm1076, %v1063, %v839
        %v1081 = vsel %vm1076, %v1064, %v841
        %v1082 = vsel %vm1076, %v1065, %v843
        %v1083 = vsel %vm1076, %v1066, %v845
        %v1084 = vsel %vm1076, %v1067, %v847
        %v1085 = vsel %vm1076, %v1068, %v849
        %v1086 = vsel %vm1076, %v1069, %v851
        %v1087 = vsel %vm1076, %v1070, %v853
        %v1088 = vsel %vm1076, %v1071, %v855
        %v1089 = vsel %vm1076, %v1072, %v857
        %v1090 = vsel %vm1076, %v1073, %v859
        %v1091 = vsel %vm1076, %v1074, %v861
        %v1092 = vsel %vm1076, %v1075, %v863
        %vm1093 = vcmask 392192
        %v1094 = vsel %vm1093, %v1077, %v897
        %v1095 = vsel %vm1093, %v1078, %v899
        %v1096 = vsel %vm1093, %v1079, %v901
        %v1097 = vsel %vm1093, %v1080, %v903
        %v1098 = vsel %vm1093, %v1081, %v905
        %v1099 = vsel %vm1093, %v1082, %v907
        %v1100 = vsel %vm1093, %v1083, %v909
        %v1101 = vsel %vm1093, %v1084, %v911
        %v1102 = vsel %vm1093, %v1085, %v913
        %v1103 = vsel %vm1093, %v1086, %v915
        %v1104 = vsel %vm1093, %v1087, %v917
        %v1105 = vsel %vm1093, %v1088, %v919
        %v1106 = vsel %vm1093, %v1089, %v921
        %v1107 = vsel %vm1093, %v1090, %v923
        %v1108 = vsel %vm1093, %v1091, %v925
        %v1109 = vsel %vm1093, %v1092, %v927
        %vm1110 = vcmask 457728
        %v1111 = vsel %vm1110, %v1094, %v961
        %v1112 = vsel %vm1110, %v1095, %v963
        %v1113 = vsel %vm1110, %v1096, %v965
        %v1114 = vsel %vm1110, %v1097, %v967
        %v1115 = vsel %vm1110, %v1098, %v969
        %v1116 = vsel %vm1110, %v1099, %v971
        %v1117 = vsel %vm1110, %v1100, %v973
        %v1118 = vsel %vm1110, %v1101, %v975
        %v1119 = vsel %vm1110, %v1102, %v977
        %v1120 = vsel %vm1110, %v1103, %v979
        %v1121 = vsel %vm1110, %v1104, %v981
        %v1122 = vsel %vm1110, %v1105, %v983
        %v1123 = vsel %vm1110, %v1106, %v985
        %v1124 = vsel %vm1110, %v1107, %v987
        %v1125 = vsel %vm1110, %v1108, %v989
        %v1126 = vsel %vm1110, %v1109, %v991
        %v1127 = vld [vmem:[%s1] sm:$0xff]
        %v1128 = vld [vmem:[%s1 + $0x8] sm:$0xff]
        %v1129 = vld [vmem:[%s1 + $0x10] sm:$0xff]
        %v1130 = vld [vmem:[%s1 + $0x18] sm:$0xff]
        %v1131 = vld [vmem:[%s1 + $0x20] sm:$0xff]
        %v1132 = vld [vmem:[%s1 + $0x28] sm:$0xff]
        %v1133 = vld [vmem:[%s1 + $0x30] sm:$0xff]
        %v1134 = vld [vmem:[%s1 + $0x38] sm:$0xff]
        %vm1135 = vcmask 523264
        %v1137 = vsel %vm1135, %v1111, 0
        %v1140 = vsel %vm1135, %v1112, 0
        %v1143 = vsel %vm1135, %v1113, 0
        %v1146 = vsel %vm1135, %v1114, 0
        %v1149 = vsel %vm1135, %v1115, 0
        %v1152 = vsel %vm1135, %v1116, 0
        %v1155 = vsel %vm1135, %v1117, 0
        %v1158 = vsel %vm1135, %v1118, 0
        %1160 = vmatprep.subr.mxu0 0.0
        %1161 = vmatpush1.msra.mxu0 %v1127
        %1162 = vmatprep.subr.mxu0 0.0
        %1163 = vmatpush1.msra.mxu0 %v1128
        %1164 = vmatprep.subr.mxu0 0.0
        %1165 = vmatpush1.msra.mxu0 %v1129
        %1166 = vmatprep.subr.mxu0 0.0
        %1167 = vmatpush1.msra.mxu0 %v1130
        %1168 = vmatprep.subr.mxu0 0.0
        %1169 = vmatpush1.msra.mxu0 %v1131
        %1170 = vmatprep.subr.mxu0 0.0
        %1171 = vmatpush1.msra.mxu0 %v1132
        %1172 = vmatprep.subr.mxu0 0.0
        %1173 = vmatpush1.msra.mxu0 %v1133
        %1174 = vmatprep.subr.mxu0 0.0
        %1175 = vmatpush1.msra.mxu0 %v1134
        %1176 = vmatprep.subr.mxu0 0.0
        %1177 = vmatpush1.msra.mxu0 0.0
        %1178 = vmatprep.subr.mxu0 0.0
        %1179 = vmatpush1.msra.mxu0 0.0
        %1180 = vmatprep.subr.mxu0 0.0
        %1181 = vmatpush1.msra.mxu0 0.0
        %1182 = vmatprep.subr.mxu0 0.0
        %1183 = vmatpush1.msra.mxu0 0.0
        %1184 = vmatprep.subr.mxu0 0.0
        %1185 = vmatpush1.msra.mxu0 0.0
        %1186 = vmatprep.subr.mxu0 0.0
        %1187 = vmatpush1.msra.mxu0 0.0
        %1188 = vmatprep.subr.mxu0 0.0
        %1189 = vmatpush1.msra.mxu0 0.0
        %1190 = vmatprep.subr.mxu0 0.0
        %1191 = vmatpush1.msra.mxu0 0.0
        %1192 = vmatprep.subr.mxu0 0.0
        %1193 = vmatpush1.msra.mxu0 0.0
        %1194 = vmatprep.subr.mxu0 0.0
        %1195 = vmatpush1.msra.mxu0 0.0
        %1196 = vmatprep.subr.mxu0 0.0
        %1197 = vmatpush1.msra.mxu0 0.0
        %1198 = vmatprep.subr.mxu0 0.0
        %1199 = vmatpush1.msra.mxu0 0.0
        %1200 = vmatprep.subr.mxu0 0.0
        %1201 = vmatpush1.msra.mxu0 0.0
        %1202 = vmatprep.subr.mxu0 0.0
        %1203 = vmatpush1.msra.mxu0 0.0
        %1204 = vmatprep.subr.mxu0 0.0
        %1205 = vmatpush1.msra.mxu0 0.0
        %1206 = vmatprep.subr.mxu0 0.0
        %1207 = vmatpush1.msra.mxu0 0.0
        %1208 = vmatprep.subr.mxu0 0.0
        %1209 = vmatpush1.msra.mxu0 0.0
        %1210 = vmatprep.subr.mxu0 0.0
        %1211 = vmatpush1.msra.mxu0 0.0
        %1212 = vmatprep.subr.mxu0 0.0
        %1213 = vmatpush1.msra.mxu0 0.0
        %1214 = vmatprep.subr.mxu0 0.0
        %1215 = vmatpush1.msra.mxu0 0.0
        %1216 = vmatprep.subr.mxu0 0.0
        %1217 = vmatpush1.msra.mxu0 0.0
        %1218 = vmatprep.subr.mxu0 0.0
        %1219 = vmatpush1.msra.mxu0 0.0
        %1220 = vmatprep.subr.mxu0 0.0
        %1221 = vmatpush1.msra.mxu0 0.0
        %1222 = vmatprep.subr.mxu0 0.0
        %1223 = vmatpush1.msra.mxu0 0.0
        %1224 = vmatprep.mubr.f32.mxu0 0.0
        %1225 = vmatmul.mubr.f32.gmra.mrb[0].mxu0 %v1137
        %v1226 = vpop.f32.mrb[0].mxu0
        %v1227 = vadd.f32 0.0, %v1226
        %v1228 = vpop.f32.mrb[0].mxu0
        %1229 = vmatprep.mubr.f32.mxu0 0.0
        %1230 = vmatmul.mubr.f32.gmra.mrb[0].mxu0 %v1140
        %v1231 = vpop.f32.mrb[0].mxu0
        %v1232 = vadd.f32 0.0, %v1231
        %v1233 = vpop.f32.mrb[0].mxu0
        %1234 = vmatprep.mubr.f32.mxu0 0.0
        %1235 = vmatmul.mubr.f32.gmra.mrb[0].mxu0 %v1143
        %v1236 = vpop.f32.mrb[0].mxu0
        %v1237 = vadd.f32 0.0, %v1236
        %v1238 = vpop.f32.mrb[0].mxu0
        %1239 = vmatprep.mubr.f32.mxu0 0.0
        %1240 = vmatmul.mubr.f32.gmra.mrb[0].mxu0 %v1146
        %v1241 = vpop.f32.mrb[0].mxu0
        %v1242 = vadd.f32 0.0, %v1241
        %v1243 = vpop.f32.mrb[0].mxu0
        %1244 = vmatprep.mubr.f32.mxu0 0.0
        %1245 = vmatmul.mubr.f32.gmra.mrb[0].mxu0 %v1149
        %v1246 = vpop.f32.mrb[0].mxu0
        %v1247 = vadd.f32 0.0, %v1246
        %v1248 = vpop.f32.mrb[0].mxu0
        %1249 = vmatprep.mubr.f32.mxu0 0.0
        %1250 = vmatmul.mubr.f32.gmra.mrb[0].mxu0 %v1152
        %v1251 = vpop.f32.mrb[0].mxu0
        %v1252 = vadd.f32 0.0, %v1251
        %v1253 = vpop.f32.mrb[0].mxu0
        %1254 = vmatprep.mubr.f32.mxu0 0.0
        %1255 = vmatmul.mubr.f32.gmra.mrb[0].mxu0 %v1155
        %v1256 = vpop.f32.mrb[0].mxu0
        %v1257 = vadd.f32 0.0, %v1256
        %v1258 = vpop.f32.mrb[0].mxu0
        %1259 = vmatprep.mubr.f32.mxu0 0.0
        %1260 = vmatmul.mubr.f32.gmra.mrb[0].mxu0 %v1158
        %v1261 = vpop.f32.mrb[0].mxu0
        %v1262 = vadd.f32 0.0, %v1261
        %v1263 = vpop.f32.mrb[0].mxu0
        %1264 = vdwg.mxu0
        %v1266 = vsel %vm1135, %v1119, 0
        %v1269 = vsel %vm1135, %v1120, 0
        %v1272 = vsel %vm1135, %v1121, 0
        %v1275 = vsel %vm1135, %v1122, 0
        %v1278 = vsel %vm1135, %v1123, 0
        %v1281 = vsel %vm1135, %v1124, 0
        %v1284 = vsel %vm1135, %v1125, 0
        %v1287 = vsel %vm1135, %v1126, 0
        %1289 = vmatprep.subr.mxu0 0.0
        %1290 = vmatpush1.msra.mxu0 %v1127
        %1291 = vmatprep.subr.mxu0 0.0
        %1292 = vmatpush1.msra.mxu0 %v1128
        %1293 = vmatprep.subr.mxu0 0.0
        %1294 = vmatpush1.msra.mxu0 %v1129
        %1295 = vmatprep.subr.mxu0 0.0
        %1296 = vmatpush1.msra.mxu0 %v1130
        %1297 = vmatprep.subr.mxu0 0.0
        %1298 = vmatpush1.msra.mxu0 %v1131
        %1299 = vmatprep.subr.mxu0 0.0
        %1300 = vmatpush1.msra.mxu0 %v1132
        %1301 = vmatprep.subr.mxu0 0.0
        %1302 = vmatpush1.msra.mxu0 %v1133
        %1303 = vmatprep.subr.mxu0 0.0
        %1304 = vmatpush1.msra.mxu0 %v1134
        %1305 = vmatprep.subr.mxu0 0.0
        %1306 = vmatpush1.msra.mxu0 0.0
        %1307 = vmatprep.subr.mxu0 0.0
        %1308 = vmatpush1.msra.mxu0 0.0
        %1309 = vmatprep.subr.mxu0 0.0
        %1310 = vmatpush1.msra.mxu0 0.0
        %1311 = vmatprep.subr.mxu0 0.0
        %1312 = vmatpush1.msra.mxu0 0.0
        %1313 = vmatprep.subr.mxu0 0.0
        %1314 = vmatpush1.msra.mxu0 0.0
        %1315 = vmatprep.subr.mxu0 0.0
        %1316 = vmatpush1.msra.mxu0 0.0
        %1317 = vmatprep.subr.mxu0 0.0
        %1318 = vmatpush1.msra.mxu0 0.0
        %1319 = vmatprep.subr.mxu0 0.0
        %1320 = vmatpush1.msra.mxu0 0.0
        %1321 = vmatprep.subr.mxu0 0.0
        %1322 = vmatpush1.msra.mxu0 0.0
        %1323 = vmatprep.subr.mxu0 0.0
        %1324 = vmatpush1.msra.mxu0 0.0
        %1325 = vmatprep.subr.mxu0 0.0
        %1326 = vmatpush1.msra.mxu0 0.0
        %1327 = vmatprep.subr.mxu0 0.0
        %1328 = vmatpush1.msra.mxu0 0.0
        %1329 = vmatprep.subr.mxu0 0.0
        %1330 = vmatpush1.msra.mxu0 0.0
        %1331 = vmatprep.subr.mxu0 0.0
        %1332 = vmatpush1.msra.mxu0 0.0
        %1333 = vmatprep.subr.mxu0 0.0
        %1334 = vmatpush1.msra.mxu0 0.0
        %1335 = vmatprep.subr.mxu0 0.0
        %1336 = vmatpush1.msra.mxu0 0.0
        %1337 = vmatprep.subr.mxu0 0.0
        %1338 = vmatpush1.msra.mxu0 0.0
        %1339 = vmatprep.subr.mxu0 0.0
        %1340 = vmatpush1.msra.mxu0 0.0
        %1341 = vmatprep.subr.mxu0 0.0
        %1342 = vmatpush1.msra.mxu0 0.0
        %1343 = vmatprep.subr.mxu0 0.0
        %1344 = vmatpush1.msra.mxu0 0.0
        %1345 = vmatprep.subr.mxu0 0.0
        %1346 = vmatpush1.msra.mxu0 0.0
        %1347 = vmatprep.subr.mxu0 0.0
        %1348 = vmatpush1.msra.mxu0 0.0
        %1349 = vmatprep.subr.mxu0 0.0
        %1350 = vmatpush1.msra.mxu0 0.0
        %1351 = vmatprep.subr.mxu0 0.0
        %1352 = vmatpush1.msra.mxu0 0.0
        %1353 = vmatprep.mubr.f32.mxu0 0.0
        %1354 = vmatmul.mubr.f32.gmra.mrb[0].mxu0 %v1266
        %v1355 = vpop.f32.mrb[0].mxu0
        %v1356 = vadd.f32 0.0, %v1355
        %v1357 = vpop.f32.mrb[0].mxu0
        %1358 = vmatprep.mubr.f32.mxu0 0.0
        %1359 = vmatmul.mubr.f32.gmra.mrb[0].mxu0 %v1269
        %v1360 = vpop.f32.mrb[0].mxu0
        %v1361 = vadd.f32 0.0, %v1360
        %v1362 = vpop.f32.mrb[0].mxu0
        %1363 = vmatprep.mubr.f32.mxu0 0.0
        %1364 = vmatmul.mubr.f32.gmra.mrb[0].mxu0 %v1272
        %v1365 = vpop.f32.mrb[0].mxu0
        %v1366 = vadd.f32 0.0, %v1365
        %v1367 = vpop.f32.mrb[0].mxu0
        %1368 = vmatprep.mubr.f32.mxu0 0.0
        %1369 = vmatmul.mubr.f32.gmra.mrb[0].mxu0 %v1275
        %v1370 = vpop.f32.mrb[0].mxu0
        %v1371 = vadd.f32 0.0, %v1370
        %v1372 = vpop.f32.mrb[0].mxu0
        %1373 = vmatprep.mubr.f32.mxu0 0.0
        %1374 = vmatmul.mubr.f32.gmra.mrb[0].mxu0 %v1278
        %v1375 = vpop.f32.mrb[0].mxu0
        %v1376 = vadd.f32 0.0, %v1375
        %v1377 = vpop.f32.mrb[0].mxu0
        %1378 = vmatprep.mubr.f32.mxu0 0.0
        %1379 = vmatmul.mubr.f32.gmra.mrb[0].mxu0 %v1281
        %v1380 = vpop.f32.mrb[0].mxu0
        %v1381 = vadd.f32 0.0, %v1380
        %v1382 = vpop.f32.mrb[0].mxu0
        %1383 = vmatprep.mubr.f32.mxu0 0.0
        %1384 = vmatmul.mubr.f32.gmra.mrb[0].mxu0 %v1284
        %v1385 = vpop.f32.mrb[0].mxu0
        %v1386 = vadd.f32 0.0, %v1385
        %v1387 = vpop.f32.mrb[0].mxu0
        %1388 = vmatprep.mubr.f32.mxu0 0.0
        %1389 = vmatmul.mubr.f32.gmra.mrb[0].mxu0 %v1287
        %v1390 = vpop.f32.mrb[0].mxu0
        %v1391 = vadd.f32 0.0, %v1390
        %v1392 = vpop.f32.mrb[0].mxu0
        %1393 = vdwg.mxu0
        %v1396 = vrot.slane %v1227, 1
        %v1397 = vrot.slane %v1356, 1
        %v1400 = vmax.f32 %v1227, %v1396
        %v1401 = vmax.f32 %v1356, %v1397
        %v1402 = vrot.slane %v1227, 2
        %v1403 = vrot.slane %v1356, 2
        %v1406 = vmax.f32 %v1400, %v1402
        %v1407 = vmax.f32 %v1401, %v1403
        %v1408 = vrot.slane %v1227, 3
        %v1409 = vrot.slane %v1356, 3
        %v1412 = vmax.f32 %v1406, %v1408
        %v1413 = vmax.f32 %v1407, %v1409
        %v1416 = vrot.slane %v1232, 1
        %v1417 = vrot.slane %v1361, 1
        %v1420 = vmax.f32 %v1232, %v1416
        %v1421 = vmax.f32 %v1361, %v1417
        %v1422 = vrot.slane %v1232, 2
        %v1423 = vrot.slane %v1361, 2
        %v1426 = vmax.f32 %v1420, %v1422
        %v1427 = vmax.f32 %v1421, %v1423
        %v1428 = vrot.slane %v1232, 3
        %v1429 = vrot.slane %v1361, 3
        %v1432 = vmax.f32 %v1426, %v1428
        %v1433 = vmax.f32 %v1427, %v1429
        %v1436 = vrot.slane %v1237, 1
        %v1437 = vrot.slane %v1366, 1
        %v1440 = vmax.f32 %v1237, %v1436
        %v1441 = vmax.f32 %v1366, %v1437
        %v1442 = vrot.slane %v1237, 2
        %v1443 = vrot.slane %v1366, 2
        %v1446 = vmax.f32 %v1440, %v1442
        %v1447 = vmax.f32 %v1441, %v1443
        %v1448 = vrot.slane %v1237, 3
        %v1449 = vrot.slane %v1366, 3
        %v1452 = vmax.f32 %v1446, %v1448
        %v1453 = vmax.f32 %v1447, %v1449
        %v1456 = vrot.slane %v1242, 1
        %v1457 = vrot.slane %v1371, 1
        %v1460 = vmax.f32 %v1242, %v1456
        %v1461 = vmax.f32 %v1371, %v1457
        %v1462 = vrot.slane %v1242, 2
        %v1463 = vrot.slane %v1371, 2
        %v1466 = vmax.f32 %v1460, %v1462
        %v1467 = vmax.f32 %v1461, %v1463
        %v1468 = vrot.slane %v1242, 3
        %v1469 = vrot.slane %v1371, 3
        %v1472 = vmax.f32 %v1466, %v1468
        %v1473 = vmax.f32 %v1467, %v1469
        %v1476 = vrot.slane %v1247, 1
        %v1477 = vrot.slane %v1376, 1
        %v1480 = vmax.f32 %v1247, %v1476
        %v1481 = vmax.f32 %v1376, %v1477
        %v1482 = vrot.slane %v1247, 2
        %v1483 = vrot.slane %v1376, 2
        %v1486 = vmax.f32 %v1480, %v1482
        %v1487 = vmax.f32 %v1481, %v1483
        %v1488 = vrot.slane %v1247, 3
        %v1489 = vrot.slane %v1376, 3
        %v1492 = vmax.f32 %v1486, %v1488
        %v1493 = vmax.f32 %v1487, %v1489
        %v1496 = vrot.slane %v1252, 1
        %v1497 = vrot.slane %v1381, 1
        %v1500 = vmax.f32 %v1252, %v1496
        %v1501 = vmax.f32 %v1381, %v1497
        %v1502 = vrot.slane %v1252, 2
        %v1503 = vrot.slane %v1381, 2
        %v1506 = vmax.f32 %v1500, %v1502
        %v1507 = vmax.f32 %v1501, %v1503
        %v1508 = vrot.slane %v1252, 3
        %v1509 = vrot.slane %v1381, 3
        %v1512 = vmax.f32 %v1506, %v1508
        %v1513 = vmax.f32 %v1507, %v1509
        %v1516 = vrot.slane %v1257, 1
        %v1517 = vrot.slane %v1386, 1
        %v1520 = vmax.f32 %v1257, %v1516
        %v1521 = vmax.f32 %v1386, %v1517
        %v1522 = vrot.slane %v1257, 2
        %v1523 = vrot.slane %v1386, 2
        %v1526 = vmax.f32 %v1520, %v1522
        %v1527 = vmax.f32 %v1521, %v1523
        %v1528 = vrot.slane %v1257, 3
        %v1529 = vrot.slane %v1386, 3
        %v1532 = vmax.f32 %v1526, %v1528
        %v1533 = vmax.f32 %v1527, %v1529
        %v1536 = vrot.slane %v1262, 1
        %v1537 = vrot.slane %v1391, 1
        %v1540 = vmax.f32 %v1262, %v1536
        %v1541 = vmax.f32 %v1391, %v1537
        %v1542 = vrot.slane %v1262, 2
        %v1543 = vrot.slane %v1391, 2
        %v1546 = vmax.f32 %v1540, %v1542
        %v1547 = vmax.f32 %v1541, %v1543
        %v1548 = vrot.slane %v1262, 3
        %v1549 = vrot.slane %v1391, 3
        %v1552 = vmax.f32 %v1546, %v1548
        %v1553 = vmax.f32 %v1547, %v1549
        %v1556 = vrot.slane %v1412, 3
        %v1557 = vrot.slane %v1413, 3
        %v1562 = vrot.slane %v1432, 6
        %v1563 = vrot.slane %v1433, 6
        %v1566 = vrot.slane %v1432, 1
        %v1567 = vrot.slane %v1433, 1
        %v1572 = vrot.slane %v1452, 4
        %v1573 = vrot.slane %v1453, 4
        %v1576 = vrot.slane %v1452, 7
        %v1577 = vrot.slane %v1453, 7
        %v1582 = vrot.slane %v1472, 2
        %v1583 = vrot.slane %v1473, 2
        %v1586 = vrot.slane %v1472, 5
        %v1587 = vrot.slane %v1473, 5
        %v1592 = vrot.slane %v1492, 3
        %v1593 = vrot.slane %v1493, 3
        %v1598 = vrot.slane %v1512, 6
        %v1599 = vrot.slane %v1513, 6
        %v1602 = vrot.slane %v1512, 1
        %v1603 = vrot.slane %v1513, 1
        %v1608 = vrot.slane %v1532, 4
        %v1609 = vrot.slane %v1533, 4
        %v1612 = vrot.slane %v1532, 7
        %v1613 = vrot.slane %v1533, 7
        %v1618 = vrot.slane %v1552, 2
        %v1619 = vrot.slane %v1553, 2
        %v1622 = vrot.slane %v1552, 5
        %v1623 = vrot.slane %v1553, 5
        %vm1626 = vcmask 1040384
        %v1627 = vsel %vm1626, %v1412, %v1556
        %v1628 = vsel %vm1626, %v1413, %v1557
        %vm1629 = vcmask 1041408
        %v1630 = vsel %vm1629, %v1627, %v1562
        %v1631 = vsel %vm1629, %v1628, %v1563
        %vm1632 = vcmask 1042432
        %v1633 = vsel %vm1632, %v1630, %v1566
        %v1634 = vsel %vm1632, %v1631, %v1567
        %vm1635 = vcmask 1043456
        %v1636 = vsel %vm1635, %v1633, %v1572
        %v1637 = vsel %vm1635, %v1634, %v1573
        %vm1638 = vcmask 1044480
        %v1639 = vsel %vm1638, %v1636, %v1576
        %v1640 = vsel %vm1638, %v1637, %v1577
        %vm1641 = vcmask 1045504
        %v1642 = vsel %vm1641, %v1639, %v1582
        %v1643 = vsel %vm1641, %v1640, %v1583
        %vm1644 = vcmask 1046528
        %v1645 = vsel %vm1644, %v1642, %v1586
        %v1646 = vsel %vm1644, %v1643, %v1587
        %v1647 = vsel %vm1626, %v1492, %v1592
        %v1648 = vsel %vm1626, %v1493, %v1593
        %v1649 = vsel %vm1629, %v1647, %v1598
        %v1650 = vsel %vm1629, %v1648, %v1599
        %v1651 = vsel %vm1632, %v1649, %v1602
        %v1652 = vsel %vm1632, %v1650, %v1603
        %v1653 = vsel %vm1635, %v1651, %v1608
        %v1654 = vsel %vm1635, %v1652, %v1609
        %v1655 = vsel %vm1638, %v1653, %v1612
        %v1656 = vsel %vm1638, %v1654, %v1613
        %v1657 = vsel %vm1641, %v1655, %v1618
        %v1658 = vsel %vm1641, %v1656, %v1619
        %v1659 = vsel %vm1644, %v1657, %v1622
        %v1660 = vsel %vm1644, %v1658, %v1623
        %v1661 = vld [vmem:[%s2] sm:$0x1]
        %v1663 = vlaneseq
        %v1664 = vshrl.u32 %v1663, 7
        %v1665 = vsub.s32 0, %v1664
        %v1666 = vrot.slane %v1661, %v1665
        %v1668 = vmul.f32 %v1645, %v1666
        %v1669 = vmul.f32 %v1659, %v1666
        %v1670 = vmul.f32 %v1646, %v1666
        %v1671 = vmul.f32 %v1660, %v1666
        %v1672 = vld [vmem:[%s3] sm:$0x1]
        %v1674 = vlaneseq
        %v1675 = vshrl.u32 %v1674, 7
        %v1676 = vsub.s32 0, %v1675
        %v1677 = vrot.slane %v1672, %v1676
        %v1679 = vadd.f32 %v1668, %v1677
        %v1680 = vadd.f32 %v1669, %v1677
        %v1681 = vadd.f32 %v1670, %v1677
        %v1682 = vadd.f32 %v1671, %v1677
        %v1687 = vrot.slane %v1679, 1
        %v1688 = vrot.slane %v1680, 1
        %v1689 = vsel %vm1644, %v1687, %v1688
        %v1690 = vrot.slane %v1681, 1
        %v1691 = vrot.slane %v1682, 1
        %v1692 = vsel %vm1644, %v1690, %v1691
        %1693 = vrot.lane.b32.xlu0 %v1689, 32
        %v1694 = vpop.permute.xlu0 %1693
        %1695 = vrot.lane.b32.xlu0 %v1688, 32
        %v1696 = vpop.permute.xlu0 %1695
        %1697 = vrot.lane.b32.xlu0 %v1692, 32
        %v1698 = vpop.permute.xlu0 %1697
        %1699 = vrot.lane.b32.xlu0 %v1691, 32
        %v1700 = vpop.permute.xlu0 %1699
        %v1705 = vrot.slane %v1679, 2
        %v1706 = vrot.slane %v1680, 2
        %v1707 = vsel %vm1641, %v1705, %v1706
        %v1708 = vrot.slane %v1681, 2
        %v1709 = vrot.slane %v1682, 2
        %v1710 = vsel %vm1641, %v1708, %v1709
        %1711 = vrot.lane.b32.xlu0 %v1707, 64
        %v1712 = vpop.permute.xlu0 %1711
        %1713 = vrot.lane.b32.xlu0 %v1706, 64
        %v1714 = vpop.permute.xlu0 %1713
        %1715 = vrot.lane.b32.xlu0 %v1710, 64
        %v1716 = vpop.permute.xlu0 %1715
        %1717 = vrot.lane.b32.xlu0 %v1709, 64
        %v1718 = vpop.permute.xlu0 %1717
        %v1723 = vrot.slane %v1679, 3
        %v1724 = vrot.slane %v1680, 3
        %v1725 = vsel %vm1638, %v1723, %v1724
        %v1726 = vrot.slane %v1681, 3
        %v1727 = vrot.slane %v1682, 3
        %v1728 = vsel %vm1638, %v1726, %v1727
        %1729 = vrot.lane.b32.xlu0 %v1725, 96
        %v1730 = vpop.permute.xlu0 %1729
        %1731 = vrot.lane.b32.xlu0 %v1724, 96
        %v1732 = vpop.permute.xlu0 %1731
        %1733 = vrot.lane.b32.xlu0 %v1728, 96
        %v1734 = vpop.permute.xlu0 %1733
        %1735 = vrot.lane.b32.xlu0 %v1727, 96
        %v1736 = vpop.permute.xlu0 %1735
        %v1741 = vrot.slane %v1679, 4
        %v1742 = vrot.slane %v1680, 4
        %v1743 = vsel %vm1635, %v1741, %v1742
        %v1744 = vrot.slane %v1681, 4
        %v1745 = vrot.slane %v1682, 4
        %v1746 = vsel %vm1635, %v1744, %v1745
        %v1751 = vrot.slane %v1679, 5
        %v1752 = vrot.slane %v1680, 5
        %v1753 = vsel %vm1632, %v1751, %v1752
        %v1754 = vrot.slane %v1681, 5
        %v1755 = vrot.slane %v1682, 5
        %v1756 = vsel %vm1632, %v1754, %v1755
        %1757 = vrot.lane.b32.xlu0 %v1753, 32
        %v1758 = vpop.permute.xlu0 %1757
        %1759 = vrot.lane.b32.xlu0 %v1752, 32
        %v1760 = vpop.permute.xlu0 %1759
        %1761 = vrot.lane.b32.xlu0 %v1756, 32
        %v1762 = vpop.permute.xlu0 %1761
        %1763 = vrot.lane.b32.xlu0 %v1755, 32
        %v1764 = vpop.permute.xlu0 %1763
        %v1769 = vrot.slane %v1679, 6
        %v1770 = vrot.slane %v1680, 6
        %v1771 = vsel %vm1629, %v1769, %v1770
        %v1772 = vrot.slane %v1681, 6
        %v1773 = vrot.slane %v1682, 6
        %v1774 = vsel %vm1629, %v1772, %v1773
        %1775 = vrot.lane.b32.xlu0 %v1771, 64
        %v1776 = vpop.permute.xlu0 %1775
        %1777 = vrot.lane.b32.xlu0 %v1770, 64
        %v1778 = vpop.permute.xlu0 %1777
        %1779 = vrot.lane.b32.xlu0 %v1774, 64
        %v1780 = vpop.permute.xlu0 %1779
        %1781 = vrot.lane.b32.xlu0 %v1773, 64
        %v1782 = vpop.permute.xlu0 %1781
        %v1787 = vrot.slane %v1679, 7
        %v1788 = vrot.slane %v1680, 7
        %v1789 = vsel %vm1626, %v1787, %v1788
        %v1790 = vrot.slane %v1681, 7
        %v1791 = vrot.slane %v1682, 7
        %v1792 = vsel %vm1626, %v1790, %v1791
        %1793 = vrot.lane.b32.xlu0 %v1789, 96
        %v1794 = vpop.permute.xlu0 %1793
        %1795 = vrot.lane.b32.xlu0 %v1788, 96
        %v1796 = vpop.permute.xlu0 %1795
        %1797 = vrot.lane.b32.xlu0 %v1792, 96
        %v1798 = vpop.permute.xlu0 %1797
        %1799 = vrot.lane.b32.xlu0 %v1791, 96
        %v1800 = vpop.permute.xlu0 %1799
        %v1805 = vsel %vm1059, %v1679, %v1694
        %v1806 = vsel %vm1059, %v1680, %v1696
        %v1807 = vsel %vm1059, %v1681, %v1698
        %v1808 = vsel %vm1059, %v1682, %v1700
        %v1809 = vsel %vm1135, %v1805, %v1712
        %v1810 = vsel %vm1135, %v1806, %v1714
        %v1811 = vsel %vm1135, %v1807, %v1716
        %v1812 = vsel %vm1135, %v1808, %v1718
        %vm1813 = vcmask 785408
        %v1814 = vsel %vm1813, %v1809, %v1730
        %v1815 = vsel %vm1813, %v1810, %v1732
        %v1816 = vsel %vm1813, %v1811, %v1734
        %v1817 = vsel %vm1813, %v1812, %v1736
        %v1818 = vsel %vm1059, %v1743, %v1758
        %v1819 = vsel %vm1059, %v1742, %v1760
        %v1820 = vsel %vm1059, %v1746, %v1762
        %v1821 = vsel %vm1059, %v1745, %v1764
        %v1822 = vsel %vm1135, %v1818, %v1776
        %v1823 = vsel %vm1135, %v1819, %v1778
        %v1824 = vsel %vm1135, %v1820, %v1780
        %v1825 = vsel %vm1135, %v1821, %v1782
        %v1826 = vsel %vm1813, %v1822, %v1794
        %v1827 = vsel %vm1813, %v1823, %v1796
        %v1828 = vsel %vm1813, %v1824, %v1798
        %v1829 = vsel %vm1813, %v1825, %v1800
        %v1830 = vld [vmem:[%s4] sm:$0xff]
        %v1831 = vld [vmem:[%s4 + $0x8] sm:$0xff]
        %v1832 = vld [vmem:[%s4 + $0x10] sm:$0xff]
        %v1833 = vld [vmem:[%s4 + $0x18] sm:$0xff]
        %v1834 = vld [vmem:[%s4 + $0x20] sm:$0xff]
        %v1835 = vld [vmem:[%s4 + $0x28] sm:$0xff]
        %v1836 = vld [vmem:[%s4 + $0x30] sm:$0xff]
        %v1837 = vld [vmem:[%s4 + $0x38] sm:$0xff]
        %v1838 = vld [vmem:[%s4 + $0x40] sm:$0xff]
        %v1839 = vld [vmem:[%s4 + $0x48] sm:$0xff]
        %v1840 = vld [vmem:[%s4 + $0x50] sm:$0xff]
        %v1841 = vld [vmem:[%s4 + $0x58] sm:$0xff]
        %v1842 = vld [vmem:[%s4 + $0x60] sm:$0xff]
        %v1843 = vld [vmem:[%s4 + $0x68] sm:$0xff]
        %v1844 = vld [vmem:[%s4 + $0x70] sm:$0xff]
        %v1845 = vld [vmem:[%s4 + $0x78] sm:$0xff]
        %v1846 = vld [vmem:[%s4 + $0x80] sm:$0xff]
        %v1847 = vld [vmem:[%s4 + $0x88] sm:$0xff]
        %v1848 = vld [vmem:[%s4 + $0x90] sm:$0xff]
        %v1849 = vld [vmem:[%s4 + $0x98] sm:$0xff]
        %v1850 = vld [vmem:[%s4 + $0xa0] sm:$0xff]
        %v1851 = vld [vmem:[%s4 + $0xa8] sm:$0xff]
        %v1852 = vld [vmem:[%s4 + $0xb0] sm:$0xff]
        %v1853 = vld [vmem:[%s4 + $0xb8] sm:$0xff]
        %v1854 = vld [vmem:[%s4 + $0xc0] sm:$0xff]
        %v1855 = vld [vmem:[%s4 + $0xc8] sm:$0xff]
        %v1856 = vld [vmem:[%s4 + $0xd0] sm:$0xff]
        %v1857 = vld [vmem:[%s4 + $0xd8] sm:$0xff]
        %v1858 = vld [vmem:[%s4 + $0xe0] sm:$0xff]
        %v1859 = vld [vmem:[%s4 + $0xe8] sm:$0xff]
        %v1860 = vld [vmem:[%s4 + $0xf0] sm:$0xff]
        %v1861 = vld [vmem:[%s4 + $0xf8] sm:$0xff]
        %1862 = vmatprep.subr.mxu0 0.0
        %1863 = vmatpush1.msra.mxu0 %v1830
        %1864 = vmatprep.subr.mxu0 0.0
        %1865 = vmatpush1.msra.mxu0 %v1831
        %1866 = vmatprep.subr.mxu0 0.0
        %1867 = vmatpush1.msra.mxu0 %v1832
        %1868 = vmatprep.subr.mxu0 0.0
        %1869 = vmatpush1.msra.mxu0 %v1833
        %1870 = vmatprep.subr.mxu0 0.0
        %1871 = vmatpush1.msra.mxu0 %v1834
        %1872 = vmatprep.subr.mxu0 0.0
        %1873 = vmatpush1.msra.mxu0 %v1835
        %1874 = vmatprep.subr.mxu0 0.0
        %1875 = vmatpush1.msra.mxu0 %v1836
        %1876 = vmatprep.subr.mxu0 0.0
        %1877 = vmatpush1.msra.mxu0 %v1837
        %1878 = vmatprep.subr.mxu0 0.0
        %1879 = vmatpush1.msra.mxu0 %v1838
        %1880 = vmatprep.subr.mxu0 0.0
        %1881 = vmatpush1.msra.mxu0 %v1839
        %1882 = vmatprep.subr.mxu0 0.0
        %1883 = vmatpush1.msra.mxu0 %v1840
        %1884 = vmatprep.subr.mxu0 0.0
        %1885 = vmatpush1.msra.mxu0 %v1841
        %1886 = vmatprep.subr.mxu0 0.0
        %1887 = vmatpush1.msra.mxu0 %v1842
        %1888 = vmatprep.subr.mxu0 0.0
        %1889 = vmatpush1.msra.mxu0 %v1843
        %1890 = vmatprep.subr.mxu0 0.0
        %1891 = vmatpush1.msra.mxu0 %v1844
        %1892 = vmatprep.subr.mxu0 0.0
        %1893 = vmatpush1.msra.mxu0 %v1845
        %1894 = vmatprep.subr.mxu0 0.0
        %1895 = vmatpush1.msra.mxu0 %v1846
        %1896 = vmatprep.subr.mxu0 0.0
        %1897 = vmatpush1.msra.mxu0 %v1847
        %1898 = vmatprep.subr.mxu0 0.0
        %1899 = vmatpush1.msra.mxu0 %v1848
        %1900 = vmatprep.subr.mxu0 0.0
        %1901 = vmatpush1.msra.mxu0 %v1849
        %1902 = vmatprep.subr.mxu0 0.0
        %1903 = vmatpush1.msra.mxu0 %v1850
        %1904 = vmatprep.subr.mxu0 0.0
        %1905 = vmatpush1.msra.mxu0 %v1851
        %1906 = vmatprep.subr.mxu0 0.0
        %1907 = vmatpush1.msra.mxu0 %v1852
        %1908 = vmatprep.subr.mxu0 0.0
        %1909 = vmatpush1.msra.mxu0 %v1853
        %1910 = vmatprep.subr.mxu0 0.0
        %1911 = vmatpush1.msra.mxu0 %v1854
        %1912 = vmatprep.subr.mxu0 0.0
        %1913 = vmatpush1.msra.mxu0 %v1855
        %1914 = vmatprep.subr.mxu0 0.0
        %1915 = vmatpush1.msra.mxu0 %v1856
        %1916 = vmatprep.subr.mxu0 0.0
        %1917 = vmatpush1.msra.mxu0 %v1857
        %1918 = vmatprep.subr.mxu0 0.0
        %1919 = vmatpush1.msra.mxu0 %v1858
        %1920 = vmatprep.subr.mxu0 0.0
        %1921 = vmatpush1.msra.mxu0 %v1859
        %1922 = vmatprep.subr.mxu0 0.0
        %1923 = vmatpush1.msra.mxu0 %v1860
        %1924 = vmatprep.subr.mxu0 0.0
        %1925 = vmatpush1.msra.mxu0 %v1861
        %1926 = vmatprep.mubr.f32.mxu0 %v1826
        %1927 = vmatmul.mubr.f32.gmra.mrb[0].mxu0 %v1814
        %v1928 = vpop.f32.mrb[0].mxu0
        %v1929 = vadd.f32 0.0, %v1928
        %v1930 = vpop.f32.mrb[0].mxu0
        %1931 = vmatprep.mubr.f32.mxu0 %v1827
        %1932 = vmatmul.mubr.f32.gmra.mrb[0].mxu0 %v1815
        %v1933 = vpop.f32.mrb[0].mxu0
        %v1934 = vpop.f32.mrb[0].mxu0
        %1935 = vdwg.mxu0
        %1936 = vmatprep.subr.mxu0 0.0
        %1937 = vmatpush1.msra.mxu0 %v1830
        %1938 = vmatprep.subr.mxu0 0.0
        %1939 = vmatpush1.msra.mxu0 %v1831
        %1940 = vmatprep.subr.mxu0 0.0
        %1941 = vmatpush1.msra.mxu0 %v1832
        %1942 = vmatprep.subr.mxu0 0.0
        %1943 = vmatpush1.msra.mxu0 %v1833
        %1944 = vmatprep.subr.mxu0 0.0
        %1945 = vmatpush1.msra.mxu0 %v1834
        %1946 = vmatprep.subr.mxu0 0.0
        %1947 = vmatpush1.msra.mxu0 %v1835
        %1948 = vmatprep.subr.mxu0 0.0
        %1949 = vmatpush1.msra.mxu0 %v1836
        %1950 = vmatprep.subr.mxu0 0.0
        %1951 = vmatpush1.msra.mxu0 %v1837
        %1952 = vmatprep.subr.mxu0 0.0
        %1953 = vmatpush1.msra.mxu0 %v1838
        %1954 = vmatprep.subr.mxu0 0.0
        %1955 = vmatpush1.msra.mxu0 %v1839
        %1956 = vmatprep.subr.mxu0 0.0
        %1957 = vmatpush1.msra.mxu0 %v1840
        %1958 = vmatprep.subr.mxu0 0.0
        %1959 = vmatpush1.msra.mxu0 %v1841
        %1960 = vmatprep.subr.mxu0 0.0
        %1961 = vmatpush1.msra.mxu0 %v1842
        %1962 = vmatprep.subr.mxu0 0.0
        %1963 = vmatpush1.msra.mxu0 %v1843
        %1964 = vmatprep.subr.mxu0 0.0
        %1965 = vmatpush1.msra.mxu0 %v1844
        %1966 = vmatprep.subr.mxu0 0.0
        %1967 = vmatpush1.msra.mxu0 %v1845
        %1968 = vmatprep.subr.mxu0 0.0
        %1969 = vmatpush1.msra.mxu0 %v1846
        %1970 = vmatprep.subr.mxu0 0.0
        %1971 = vmatpush1.msra.mxu0 %v1847
        %1972 = vmatprep.subr.mxu0 0.0
        %1973 = vmatpush1.msra.mxu0 %v1848
        %1974 = vmatprep.subr.mxu0 0.0
        %1975 = vmatpush1.msra.mxu0 %v1849
        %1976 = vmatprep.subr.mxu0 0.0
        %1977 = vmatpush1.msra.mxu0 %v1850
        %1978 = vmatprep.subr.mxu0 0.0
        %1979 = vmatpush1.msra.mxu0 %v1851
        %1980 = vmatprep.subr.mxu0 0.0
        %1981 = vmatpush1.msra.mxu0 %v1852
        %1982 = vmatprep.subr.mxu0 0.0
        %1983 = vmatpush1.msra.mxu0 %v1853
        %1984 = vmatprep.subr.mxu0 0.0
        %1985 = vmatpush1.msra.mxu0 %v1854
        %1986 = vmatprep.subr.mxu0 0.0
        %1987 = vmatpush1.msra.mxu0 %v1855
        %1988 = vmatprep.subr.mxu0 0.0
        %1989 = vmatpush1.msra.mxu0 %v1856
        %1990 = vmatprep.subr.mxu0 0.0
        %1991 = vmatpush1.msra.mxu0 %v1857
        %1992 = vmatprep.subr.mxu0 0.0
        %1993 = vmatpush1.msra.mxu0 %v1858
        %1994 = vmatprep.subr.mxu0 0.0
        %1995 = vmatpush1.msra.mxu0 %v1859
        %1996 = vmatprep.subr.mxu0 0.0
        %1997 = vmatpush1.msra.mxu0 %v1860
        %1998 = vmatprep.subr.mxu0 0.0
        %1999 = vmatpush1.msra.mxu0 %v1861
        %2000 = vmatprep.mubr.f32.mxu0 %v1828
        %2001 = vmatmul.mubr.f32.gmra.mrb[0].mxu0 %v1816
        %v2002 = vpop.f32.mrb[0].mxu0
        %v2003 = vadd.f32 0.0, %v2002
        %v2004 = vpop.f32.mrb[0].mxu0
        %2005 = vmatprep.mubr.f32.mxu0 %v1829
        %2006 = vmatmul.mubr.f32.gmra.mrb[0].mxu0 %v1817
        %v2007 = vpop.f32.mrb[0].mxu0
        %v2008 = vpop.f32.mrb[0].mxu0
        %2009 = vdwg.mxu0
        %v2012 = vrot.slane %v1929, 1
        %v2013 = vrot.slane %v2003, 1
        %v2016 = vmax.f32 %v1929, %v2012
        %v2017 = vmax.f32 %v2003, %v2013
        %v2018 = vrot.slane %v1929, 2
        %v2019 = vrot.slane %v2003, 2
        %v2022 = vmax.f32 %v2016, %v2018
        %v2023 = vmax.f32 %v2017, %v2019
        %v2024 = vrot.slane %v1929, 3
        %v2025 = vrot.slane %v2003, 3
        %v2028 = vmax.f32 %v2022, %v2024
        %v2029 = vmax.f32 %v2023, %v2025
        %v2032 = vrot.slane %v2028, 3
        %v2033 = vrot.slane %v2029, 3
        %v2036 = vsel %vm1626, %v2028, %v2032
        %v2037 = vsel %vm1626, %v2029, %v2033
        %v2038 = vld [vmem:[%s5] sm:$0x1]
        %v2040 = vlaneseq
        %v2041 = vshrl.u32 %v2040, 7
        %v2042 = vsub.s32 0, %v2041
        %v2043 = vrot.slane %v2038, %v2042
        %v2045 = vmul.f32 %v2036, %v2043
        %v2046 = vmul.f32 %v2037, %v2043
        %v2047 = vld [vmem:[%s6] sm:$0x1]
        %v2049 = vlaneseq
        %v2050 = vshrl.u32 %v2049, 7
        %v2051 = vsub.s32 0, %v2050
        %v2052 = vrot.slane %v2047, %v2051
        %v2054 = vadd.f32 %v2045, %v2052
        %v2055 = vadd.f32 %v2046, %v2052
        %vm2056 = vcmask 254976
        %2057 = vst.msk [vmem:[%s430] sm:$0x3] %vm2056, %v2054
        %2058 = vst.msk [vmem:[%s430 + $0x2] sm:$0x3] %vm2056, %v2055
        %v2061 = vrot.slane %v2054, 1
        %v2062 = vrot.slane %v2055, 1
        %2063 = vrot.lane.b32.xlu0 %v2061, 32
        %v2064 = vpop.permute.xlu0 %2063
        %2065 = vrot.lane.b32.xlu0 %v2062, 32
        %v2066 = vpop.permute.xlu0 %2065
        %v2069 = vsel %vm1059, %v2054, %v2064
        %v2070 = vsel %vm1059, %v2055, %v2066
        %v2071 = vld [vmem:[%s7] sm:$0xff]
        %v2072 = vld [vmem:[%s7 + $0x8] sm:$0xff]
        %v2073 = vld [vmem:[%s7 + $0x10] sm:$0xff]
        %v2074 = vld [vmem:[%s7 + $0x18] sm:$0xff]
        %v2075 = vld [vmem:[%s7 + $0x20] sm:$0xff]
        %v2076 = vld [vmem:[%s7 + $0x28] sm:$0xff]
        %v2077 = vld [vmem:[%s7 + $0x30] sm:$0xff]
        %v2078 = vld [vmem:[%s7 + $0x38] sm:$0xff]
        %v2079 = vld [vmem:[%s8] sm:$0x1]
        %v2081 = vsel %vm1135, %v2069, 0
        %2083 = vmatprep.subr.mxu0 0.0
        %2084 = vmatpush1.msra.mxu0 %v2071
        %2085 = vmatprep.subr.mxu0 0.0
        %2086 = vmatpush1.msra.mxu0 %v2072
        %2087 = vmatprep.subr.mxu0 0.0
        %2088 = vmatpush1.msra.mxu0 %v2073
        %2089 = vmatprep.subr.mxu0 0.0
        %2090 = vmatpush1.msra.mxu0 %v2074
        %2091 = vmatprep.subr.mxu0 0.0
        %2092 = vmatpush1.msra.mxu0 %v2075
        %2093 = vmatprep.subr.mxu0 0.0
        %2094 = vmatpush1.msra.mxu0 %v2076
        %2095 = vmatprep.subr.mxu0 0.0
        %2096 = vmatpush1.msra.mxu0 %v2077
        %2097 = vmatprep.subr.mxu0 0.0
        %2098 = vmatpush1.msra.mxu0 %v2078
        %2099 = vmatprep.subr.mxu0 0.0
        %2100 = vmatpush1.msra.mxu0 0.0
        %2101 = vmatprep.subr.mxu0 0.0
        %2102 = vmatpush1.msra.mxu0 0.0
        %2103 = vmatprep.subr.mxu0 0.0
        %2104 = vmatpush1.msra.mxu0 0.0
        %2105 = vmatprep.subr.mxu0 0.0
        %2106 = vmatpush1.msra.mxu0 0.0
        %2107 = vmatprep.subr.mxu0 0.0
        %2108 = vmatpush1.msra.mxu0 0.0
        %2109 = vmatprep.subr.mxu0 0.0
        %2110 = vmatpush1.msra.mxu0 0.0
        %2111 = vmatprep.subr.mxu0 0.0
        %2112 = vmatpush1.msra.mxu0 0.0
        %2113 = vmatprep.subr.mxu0 0.0
        %2114 = vmatpush1.msra.mxu0 0.0
        %2115 = vmatprep.subr.mxu0 0.0
        %2116 = vmatpush1.msra.mxu0 0.0
        %2117 = vmatprep.subr.mxu0 0.0
        %2118 = vmatpush1.msra.mxu0 0.0
        %2119 = vmatprep.subr.mxu0 0.0
        %2120 = vmatpush1.msra.mxu0 0.0
        %2121 = vmatprep.subr.mxu0 0.0
        %2122 = vmatpush1.msra.mxu0 0.0
        %2123 = vmatprep.subr.mxu0 0.0
        %2124 = vmatpush1.msra.mxu0 0.0
        %2125 = vmatprep.subr.mxu0 0.0
        %2126 = vmatpush1.msra.mxu0 0.0
        %2127 = vmatprep.subr.mxu0 0.0
        %2128 = vmatpush1.msra.mxu0 0.0
        %2129 = vmatprep.subr.mxu0 0.0
        %2130 = vmatpush1.msra.mxu0 0.0
        %2131 = vmatprep.subr.mxu0 0.0
        %2132 = vmatpush1.msra.mxu0 0.0
        %2133 = vmatprep.subr.mxu0 0.0
        %2134 = vmatpush1.msra.mxu0 0.0
        %2135 = vmatprep.subr.mxu0 0.0
        %2136 = vmatpush1.msra.mxu0 0.0
        %2137 = vmatprep.subr.mxu0 0.0
        %2138 = vmatpush1.msra.mxu0 0.0
        %2139 = vmatprep.subr.mxu0 0.0
        %2140 = vmatpush1.msra.mxu0 0.0
        %2141 = vmatprep.subr.mxu0 0.0
        %2142 = vmatpush1.msra.mxu0 0.0
        %2143 = vmatprep.subr.mxu0 0.0
        %2144 = vmatpush1.msra.mxu0 0.0
        %2145 = vmatprep.subr.mxu0 0.0
        %2146 = vmatpush1.msra.mxu0 0.0
        %2147 = vmatprep.mubr.f32.mxu0 0.0
        %2148 = vmatmul.mubr.f32.gmra.mrb[0].mxu0 %v2081
        %v2149 = vpop.f32.mrb[0].mxu0
        %v2150 = vadd.f32 %v2079, %v2149
        %v2151 = vpop.f32.mrb[0].mxu0
        %2152 = vdwg.mxu0
        %v2154 = vsel %vm1135, %v2070, 0
        %2156 = vmatprep.subr.mxu0 0.0
        %2157 = vmatpush1.msra.mxu0 %v2071
        %2158 = vmatprep.subr.mxu0 0.0
        %2159 = vmatpush1.msra.mxu0 %v2072
        %2160 = vmatprep.subr.mxu0 0.0
        %2161 = vmatpush1.msra.mxu0 %v2073
        %2162 = vmatprep.subr.mxu0 0.0
        %2163 = vmatpush1.msra.mxu0 %v2074
        %2164 = vmatprep.subr.mxu0 0.0
        %2165 = vmatpush1.msra.mxu0 %v2075
        %2166 = vmatprep.subr.mxu0 0.0
        %2167 = vmatpush1.msra.mxu0 %v2076
        %2168 = vmatprep.subr.mxu0 0.0
        %2169 = vmatpush1.msra.mxu0 %v2077
        %2170 = vmatprep.subr.mxu0 0.0
        %2171 = vmatpush1.msra.mxu0 %v2078
        %2172 = vmatprep.subr.mxu0 0.0
        %2173 = vmatpush1.msra.mxu0 0.0
        %2174 = vmatprep.subr.mxu0 0.0
        %2175 = vmatpush1.msra.mxu0 0.0
        %2176 = vmatprep.subr.mxu0 0.0
        %2177 = vmatpush1.msra.mxu0 0.0
        %2178 = vmatprep.subr.mxu0 0.0
        %2179 = vmatpush1.msra.mxu0 0.0
        %2180 = vmatprep.subr.mxu0 0.0
        %2181 = vmatpush1.msra.mxu0 0.0
        %2182 = vmatprep.subr.mxu0 0.0
        %2183 = vmatpush1.msra.mxu0 0.0
        %2184 = vmatprep.subr.mxu0 0.0
        %2185 = vmatpush1.msra.mxu0 0.0
        %2186 = vmatprep.subr.mxu0 0.0
        %2187 = vmatpush1.msra.mxu0 0.0
        %2188 = vmatprep.subr.mxu0 0.0
        %2189 = vmatpush1.msra.mxu0 0.0
        %2190 = vmatprep.subr.mxu0 0.0
        %2191 = vmatpush1.msra.mxu0 0.0
        %2192 = vmatprep.subr.mxu0 0.0
        %2193 = vmatpush1.msra.mxu0 0.0
        %2194 = vmatprep.subr.mxu0 0.0
        %2195 = vmatpush1.msra.mxu0 0.0
        %2196 = vmatprep.subr.mxu0 0.0
        %2197 = vmatpush1.msra.mxu0 0.0
        %2198 = vmatprep.subr.mxu0 0.0
        %2199 = vmatpush1.msra.mxu0 0.0
        %2200 = vmatprep.subr.mxu0 0.0
        %2201 = vmatpush1.msra.mxu0 0.0
        %2202 = vmatprep.subr.mxu0 0.0
        %2203 = vmatpush1.msra.mxu0 0.0
        %2204 = vmatprep.subr.mxu0 0.0
        %2205 = vmatpush1.msra.mxu0 0.0
        %2206 = vmatprep.subr.mxu0 0.0
        %2207 = vmatpush1.msra.mxu0 0.0
        %2208 = vmatprep.subr.mxu0 0.0
        %2209 = vmatpush1.msra.mxu0 0.0
        %2210 = vmatprep.subr.mxu0 0.0
        %2211 = vmatpush1.msra.mxu0 0.0
        %2212 = vmatprep.subr.mxu0 0.0
        %2213 = vmatpush1.msra.mxu0 0.0
        %2214 = vmatprep.subr.mxu0 0.0
        %2215 = vmatpush1.msra.mxu0 0.0
        %2216 = vmatprep.subr.mxu0 0.0
        %2217 = vmatpush1.msra.mxu0 0.0
        %2218 = vmatprep.subr.mxu0 0.0
        %2219 = vmatpush1.msra.mxu0 0.0
        %2220 = vmatprep.mubr.f32.mxu0 0.0
        %2221 = vmatmul.mubr.f32.gmra.mrb[0].mxu0 %v2154
        %v2222 = vpop.f32.mrb[0].mxu0
        %v2223 = vadd.f32 %v2079, %v2222
        %v2224 = vpop.f32.mrb[0].mxu0
        %2225 = vdwg.mxu0
        %v2226 = vtanh.pop %v2150
        %v2227 = vtanh.pop %v2223
        %v2228 = vld [vmem:[%s9] sm:$0xff]
        %v2229 = vld [vmem:[%s9 + $0x8] sm:$0xff]
        %v2230 = vld [vmem:[%s9 + $0x10] sm:$0xff]
        %v2231 = vld [vmem:[%s9 + $0x18] sm:$0xff]
        %v2232 = vld [vmem:[%s9 + $0x20] sm:$0xff]
        %v2233 = vld [vmem:[%s9 + $0x28] sm:$0xff]
        %v2234 = vld [vmem:[%s9 + $0x30] sm:$0xff]
        %v2235 = vld [vmem:[%s9 + $0x38] sm:$0xff]
        %v2236 = vld [vmem:[%s10] sm:$0x1]
        %v2238 = vsel %vm1135, %v2226, 0
        %2240 = vmatprep.subr.mxu0 0.0
        %2241 = vmatpush1.msra.mxu0 %v2228
        %2242 = vmatprep.subr.mxu0 0.0
        %2243 = vmatpush1.msra.mxu0 %v2229
        %2244 = vmatprep.subr.mxu0 0.0
        %2245 = vmatpush1.msra.mxu0 %v2230
        %2246 = vmatprep.subr.mxu0 0.0
        %2247 = vmatpush1.msra.mxu0 %v2231
        %2248 = vmatprep.subr.mxu0 0.0
        %2249 = vmatpush1.msra.mxu0 %v2232
        %2250 = vmatprep.subr.mxu0 0.0
        %2251 = vmatpush1.msra.mxu0 %v2233
        %2252 = vmatprep.subr.mxu0 0.0
        %2253 = vmatpush1.msra.mxu0 %v2234
        %2254 = vmatprep.subr.mxu0 0.0
        %2255 = vmatpush1.msra.mxu0 %v2235
        %2256 = vmatprep.subr.mxu0 0.0
        %2257 = vmatpush1.msra.mxu0 0.0
        %2258 = vmatprep.subr.mxu0 0.0
        %2259 = vmatpush1.msra.mxu0 0.0
        %2260 = vmatprep.subr.mxu0 0.0
        %2261 = vmatpush1.msra.mxu0 0.0
        %2262 = vmatprep.subr.mxu0 0.0
        %2263 = vmatpush1.msra.mxu0 0.0
        %2264 = vmatprep.subr.mxu0 0.0
        %2265 = vmatpush1.msra.mxu0 0.0
        %2266 = vmatprep.subr.mxu0 0.0
        %2267 = vmatpush1.msra.mxu0 0.0
        %2268 = vmatprep.subr.mxu0 0.0
        %2269 = vmatpush1.msra.mxu0 0.0
        %2270 = vmatprep.subr.mxu0 0.0
        %2271 = vmatpush1.msra.mxu0 0.0
        %2272 = vmatprep.subr.mxu0 0.0
        %2273 = vmatpush1.msra.mxu0 0.0
        %2274 = vmatprep.subr.mxu0 0.0
        %2275 = vmatpush1.msra.mxu0 0.0
        %2276 = vmatprep.subr.mxu0 0.0
        %2277 = vmatpush1.msra.mxu0 0.0
        %2278 = vmatprep.subr.mxu0 0.0
        %2279 = vmatpush1.msra.mxu0 0.0
        %2280 = vmatprep.subr.mxu0 0.0
        %2281 = vmatpush1.msra.mxu0 0.0
        %2282 = vmatprep.subr.mxu0 0.0
        %2283 = vmatpush1.msra.mxu0 0.0
        %2284 = vmatprep.subr.mxu0 0.0
        %2285 = vmatpush1.msra.mxu0 0.0
        %2286 = vmatprep.subr.mxu0 0.0
        %2287 = vmatpush1.msra.mxu0 0.0
        %2288 = vmatprep.subr.mxu0 0.0
        %2289 = vmatpush1.msra.mxu0 0.0
        %2290 = vmatprep.subr.mxu0 0.0
        %2291 = vmatpush1.msra.mxu0 0.0
        %2292 = vmatprep.subr.mxu0 0.0
        %2293 = vmatpush1.msra.mxu0 0.0
        %2294 = vmatprep.subr.mxu0 0.0
        %2295 = vmatpush1.msra.mxu0 0.0
        %2296 = vmatprep.subr.mxu0 0.0
        %2297 = vmatpush1.msra.mxu0 0.0
        %2298 = vmatprep.subr.mxu0 0.0
        %2299 = vmatpush1.msra.mxu0 0.0
        %2300 = vmatprep.subr.mxu0 0.0
        %2301 = vmatpush1.msra.mxu0 0.0
        %2302 = vmatprep.subr.mxu0 0.0
        %2303 = vmatpush1.msra.mxu0 0.0
        %2304 = vmatprep.mubr.f32.mxu0 0.0
        %2305 = vmatmul.mubr.f32.gmra.mrb[0].mxu0 %v2238
        %v2306 = vpop.f32.mrb[0].mxu0
        %v2307 = vadd.f32 %v2236, %v2306
        %v2308 = vpop.f32.mrb[0].mxu0
        %2309 = vdwg.mxu0
        %v2311 = vsel %vm1135, %v2227, 0
        %2313 = vmatprep.subr.mxu0 0.0
        %2314 = vmatpush1.msra.mxu0 %v2228
        %2315 = vmatprep.subr.mxu0 0.0
        %2316 = vmatpush1.msra.mxu0 %v2229
        %2317 = vmatprep.subr.mxu0 0.0
        %2318 = vmatpush1.msra.mxu0 %v2230
        %2319 = vmatprep.subr.mxu0 0.0
        %2320 = vmatpush1.msra.mxu0 %v2231
        %2321 = vmatprep.subr.mxu0 0.0
        %2322 = vmatpush1.msra.mxu0 %v2232
        %2323 = vmatprep.subr.mxu0 0.0
        %2324 = vmatpush1.msra.mxu0 %v2233
        %2325 = vmatprep.subr.mxu0 0.0
        %2326 = vmatpush1.msra.mxu0 %v2234
        %2327 = vmatprep.subr.mxu0 0.0
        %2328 = vmatpush1.msra.mxu0 %v2235
        %2329 = vmatprep.subr.mxu0 0.0
        %2330 = vmatpush1.msra.mxu0 0.0
        %2331 = vmatprep.subr.mxu0 0.0
        %2332 = vmatpush1.msra.mxu0 0.0
        %2333 = vmatprep.subr.mxu0 0.0
        %2334 = vmatpush1.msra.mxu0 0.0
        %2335 = vmatprep.subr.mxu0 0.0
        %2336 = vmatpush1.msra.mxu0 0.0
        %2337 = vmatprep.subr.mxu0 0.0
        %2338 = vmatpush1.msra.mxu0 0.0
        %2339 = vmatprep.subr.mxu0 0.0
        %2340 = vmatpush1.msra.mxu0 0.0
        %2341 = vmatprep.subr.mxu0 0.0
        %2342 = vmatpush1.msra.mxu0 0.0
        %2343 = vmatprep.subr.mxu0 0.0
        %2344 = vmatpush1.msra.mxu0 0.0
        %2345 = vmatprep.subr.mxu0 0.0
        %2346 = vmatpush1.msra.mxu0 0.0
        %2347 = vmatprep.subr.mxu0 0.0
        %2348 = vmatpush1.msra.mxu0 0.0
        %2349 = vmatprep.subr.mxu0 0.0
        %2350 = vmatpush1.msra.mxu0 0.0
        %2351 = vmatprep.subr.mxu0 0.0
        %2352 = vmatpush1.msra.mxu0 0.0
        %2353 = vmatprep.subr.mxu0 0.0
        %2354 = vmatpush1.msra.mxu0 0.0
        %2355 = vmatprep.subr.mxu0 0.0
        %2356 = vmatpush1.msra.mxu0 0.0
        %2357 = vmatprep.subr.mxu0 0.0
        %2358 = vmatpush1.msra.mxu0 0.0
        %2359 = vmatprep.subr.mxu0 0.0
        %2360 = vmatpush1.msra.mxu0 0.0
        %2361 = vmatprep.subr.mxu0 0.0
        %2362 = vmatpush1.msra.mxu0 0.0
        %2363 = vmatprep.subr.mxu0 0.0
        %2364 = vmatpush1.msra.mxu0 0.0
        %2365 = vmatprep.subr.mxu0 0.0
        %2366 = vmatpush1.msra.mxu0 0.0
        %2367 = vmatprep.subr.mxu0 0.0
        %2368 = vmatpush1.msra.mxu0 0.0
        %2369 = vmatprep.subr.mxu0 0.0
        %2370 = vmatpush1.msra.mxu0 0.0
        %2371 = vmatprep.subr.mxu0 0.0
        %2372 = vmatpush1.msra.mxu0 0.0
        %2373 = vmatprep.subr.mxu0 0.0
        %2374 = vmatpush1.msra.mxu0 0.0
        %2375 = vmatprep.subr.mxu0 0.0
        %2376 = vmatpush1.msra.mxu0 0.0
        %2377 = vmatprep.mubr.f32.mxu0 0.0
        %2378 = vmatmul.mubr.f32.gmra.mrb[0].mxu0 %v2311
        %v2379 = vpop.f32.mrb[0].mxu0
        %v2380 = vadd.f32 %v2236, %v2379
        %v2381 = vpop.f32.mrb[0].mxu0
        %2382 = vdwg.mxu0
        %vm2383 = vcmask 24576
        %2384 = vst.msk [vmem:[%s410] sm:$0x1] %vm2383, %v2307
        %2385 = vst.msk [vmem:[%s410 + $0x1] sm:$0x1] %vm2383, %v2380
        %s2386 = sand.u32 %s271, 1
        %s2387 = scalar_lea.sflag [#allocation3], %s2386
        %s2388 = sand.u32 %s271, 1
        %s2389 = smul.addr %s2388, 2
        %s2390 = scalar_lea.vmem [#allocation2], %s2389
        %s2391 = smul.u32 2, %s27
        %p2392 = scmp.lt.s32.totalorder %s2391, 3
        %s2393 = scalar_select %p2392, %s2391, 3
        %s2394 = smul.addr %s2393, 2
        %s2395 = scalar_lea.vmem %s12, %s2394
        // Predicated region
        $region65: #{_lambda_.1} parent=63 // pred_check
          %p2396 = pneg %p281
        $region66: #{_lambda_.1} parent=63 // pred_check_branch
          %2398 = sbr.rel (%p2396) target = $region68
        $region67: #{_lambda_.1} parent=63 // pred_region
          %s2399 = smul.u32 2, %s27
          %s2401 = ssub.s32 32, 32
          %2402 = vsyncadd %s2387, %s2401
          %s2403 = smul.addr %s2399, 16
          %s2404 = scalar_lea.hbm %s11, %s2403
          %s2405 = sshll.u32 %s2390, 4
          %s2406 = int_to_ptr.vmem [resolvable:$true] %s2405
          %2411 = dma.vmem_to_hbm [thread:$0]  %s2406, 32, %s2404, %s2387, 16, 16, 1
        $region68: #{_lambda_.1} parent=63 // pred_fallthru
          _
        // Predicated region
        $region69: #{_lambda_.1} parent=63 // pred_check
          %p2412 = pneg %p307
        $region70: #{_lambda_.1} parent=63 // pred_check_branch
          %2414 = sbr.rel (%p2412) target = $region72
        $region71: #{_lambda_.1} parent=63 // pred_region
          %s2415 = smul.u32 2, %s27
        $region72: #{_lambda_.1} parent=63 // pred_fallthru
          _
      $region64: #{_lambda_.1} parent=5 // pred_fallthru
        _
      %p2416 = scmp.le.s32.totalorder 2, %s22
      // Predicated region
      $region73: #{_lambda_.1} parent=5 // pred_check
        %p2417 = pneg %p2416
      $region74: #{_lambda_.1} parent=5 // pred_check_branch
        %2419 = sbr.rel (%p2417) target = $region76
      $region75: #{_lambda_.1} parent=5 // pred_region
        %s2420 = ssub.s32 %s22, 2
        // Predicated region
        $region77: #{_lambda_.1} parent=75 // pred_check
          %p2421 = pneg %p287
        $region78: #{_lambda_.1} parent=75 // pred_check_branch
          %2423 = sbr.rel (%p2421) target = $region80
        $region79: #{_lambda_.1} parent=75 // pred_region
          %s2424 = sand.u32 %s272, 1
          %s2425 = scalar_lea.sflag [#allocation3], %s2424
          %s2426 = sand.u32 %s272, 1
          %s2427 = smul.addr %s2426, 2
          %s2428 = scalar_lea.vmem [#allocation2], %s2427
          %2429 = dma.done %s2425, 32
        $region80: #{_lambda_.1} parent=75 // pred_fallthru
          _
        // Predicated region
        $region81: #{_lambda_.1} parent=75 // pred_check
          %p2430 = pneg %p313
        $region82: #{_lambda_.1} parent=75 // pred_check_branch
          %2432 = sbr.rel (%p2430) target = $region84
        $region83: #{_lambda_.1} parent=75 // pred_region
          %s2433 = smul.u32 2, %s28
          %p2434 = scmp.lt.s32.totalorder %s2433, 3
          %s2435 = scalar_select %p2434, %s2433, 3
          %s2436 = smul.addr %s2435, 2
          %s2437 = scalar_lea.vmem %s12, %s2436
        $region84: #{_lambda_.1} parent=75 // pred_fallthru
          _
      $region76: #{_lambda_.1} parent=5 // pred_fallthru
        _
    $region6: #{_lambda_.1} parent=1 // loop_footer
      %s26 = sadd.s32 1, %s22
    $region7: #{_lambda_.1} parent=1 // loop_footer_branch
      %21 = sbr.rel target = $region3
    $region8: #{_lambda_.1} parent=1 // loop_exit
      _
    %2438 = vsyncpa [#allocation3], 1
    %s2439 = scalar_lea.sflag [#allocation3], 1
    %2440 = vsyncpa %s2439, 1

</llo_original>
